<compile_context>
chip_gen: v5e
topology: v5e:2x2
jax: 0.10.0
libtpu: 0.0.40
codegen_flags: <defaults>
</compile_context>

<pallas_src>
import math
import functools

import jax
import jax.numpy as jnp
from jax.experimental import pallas as pl
from jax.experimental.pallas import tpu as pltpu


def transformer_block_kernel(x_ref,
                             wq_ref, bq_ref, wkv_ref, bkv_ref,
                             wo_ref, bo_ref,
                             ln1g_ref, ln1b_ref,
                             w1_ref, b1_ref, w2_ref, b2_ref,
                             ln2g_ref, ln2b_ref,
                             o_ref,
                             *, num_heads, head_dim, q_tile):
    H, hd = num_heads, head_dim
    E = H * hd
    T = x_ref.shape[0]
    qi = pl.program_id(1)
    row0 = pl.multiple_of(qi * q_tile, q_tile)

    x_full = x_ref[...]                                 # (T, E)  f32
    x_tile = x_ref[pl.ds(row0, q_tile), :]              # (TQ, E) f32 (residual source)

    xf_bf = x_full.astype(jnp.bfloat16)
    xt_bf = x_tile.astype(jnp.bfloat16)

    # ---- projections: Q from the query tile, K|V packed in one MXU pass ----
    q = jnp.dot(xt_bf, wq_ref[...], preferred_element_type=jnp.float32) + bq_ref[...]
    kv = jnp.dot(xf_bf, wkv_ref[...], preferred_element_type=jnp.float32) + bkv_ref[...]
    k = kv[:, :E]                                        # (T, E)
    v = kv[:, E:]                                        # (T, E)

    # ---- batched per-head attention (no per-head loop / lane slicing / concat) ----
    qh = q.reshape(q_tile, H, hd).transpose(1, 0, 2)     # (H, TQ, hd)
    kh = k.reshape(T, H, hd).transpose(1, 0, 2)          # (H, T,  hd)
    vh = v.reshape(T, H, hd).transpose(1, 0, 2)          # (H, T,  hd)

    scale = 1.0 / math.sqrt(hd)
    s = jnp.einsum("htd,hsd->hts",
                   qh.astype(jnp.bfloat16), kh.astype(jnp.bfloat16),
                   preferred_element_type=jnp.float32) * scale      # (H, TQ, T) f32
    s = s - jnp.max(s, axis=-1, keepdims=True)
    p = jnp.exp(s)
    p = p * pl.reciprocal(jnp.sum(p, axis=-1, keepdims=True), approx=True)
    ctx = jnp.einsum("hts,hsd->htd",
                     p.astype(jnp.bfloat16), vh.astype(jnp.bfloat16),
                     preferred_element_type=jnp.float32)            # (H, TQ, hd)
    attn = ctx.transpose(1, 0, 2).reshape(q_tile, E)                # (TQ, E)

    # ---- output projection (dropout = identity) ----
    attn = jnp.dot(attn.astype(jnp.bfloat16), wo_ref[...],
                   preferred_element_type=jnp.float32) + bo_ref[...]

    def layer_norm(z, g, b, eps=1e-5):
        mu = jnp.mean(z, axis=-1, keepdims=True)
        var = jnp.mean((z - mu) ** 2, axis=-1, keepdims=True)
        return (z - mu) * jax.lax.rsqrt(var + eps) * g + b

    # ---- residual + LN1 ----
    x1 = layer_norm(x_tile + attn, ln1g_ref[...], ln1b_ref[...])

    # ---- FFN: Linear -> ReLU -> Linear (dropout = identity) ----
    h1 = jnp.maximum(
        jnp.dot(x1.astype(jnp.bfloat16), w1_ref[...],
                preferred_element_type=jnp.float32) + b1_ref[...], 0.0)
    f = jnp.dot(h1.astype(jnp.bfloat16), w2_ref[...],
                preferred_element_type=jnp.float32) + b2_ref[...]

    # ---- residual + LN2 ----
    o_ref[...] = layer_norm(x1 + f, ln2g_ref[...], ln2b_ref[...]).astype(o_ref.dtype)


def transformer_block(x, params, *, num_heads, q_tile=None):
    B, T, E = x.shape
    assert E % num_heads == 0
    head_dim = E // num_heads
    F = params["w1"].shape[1]

    if q_tile is None:
        q_tile = T if T <= 128 else 128
    assert T % q_tile == 0 and q_tile % 8 == 0, "query tile must divide T and be a multiple of 8"
    n_qt = T // q_tile

    # Pack K|V weights/biases; weights go to the kernel in bf16 (f32 MXU accumulation).
    wq = params["wq"].astype(jnp.bfloat16)
    wkv = jnp.concatenate([params["wk"], params["wv"]], axis=1).astype(jnp.bfloat16)
    bkv = jnp.concatenate([params["bk"], params["bv"]], axis=1)
    wo = params["wo"].astype(jnp.bfloat16)
    w1 = params["w1"].astype(jnp.bfloat16)
    w2 = params["w2"].astype(jnp.bfloat16)

    def rep(shape):
        nd = len(shape)
        return pl.BlockSpec(shape, lambda b, qi, _n=nd: (0,) * _n)

    in_specs = [
        pl.BlockSpec((None, T, E), lambda b, qi: (b, 0, 0)),   # x: (T, E) per batch, leading dim squeezed
        rep((E, E)), rep((1, E)),                              # Wq, bq
        rep((E, 2 * E)), rep((1, 2 * E)),                      # W_kv packed, b_kv packed
        rep((E, E)), rep((1, E)),                              # Wo, bo
        rep((1, E)), rep((1, E)),                              # ln1 gamma, beta
        rep((E, F)), rep((1, F)),                              # W1, b1
        rep((F, E)), rep((1, E)),                              # W2, b2
        rep((1, E)), rep((1, E)),                              # ln2 gamma, beta
    ]
    out_specs = pl.BlockSpec((None, q_tile, E), lambda b, qi: (b, qi, 0))

    kernel = functools.partial(transformer_block_kernel,
                               num_heads=num_heads, head_dim=head_dim, q_tile=q_tile)
    return pl.pallas_call(
        kernel,
        out_shape=jax.ShapeDtypeStruct((B, T, E), jnp.float32),
        grid=(B, n_qt),
        in_specs=in_specs,
        out_specs=out_specs,
        compiler_params=pltpu.CompilerParams(
            dimension_semantics=("parallel", "parallel"),
            vmem_limit_bytes=48 * 1024 * 1024,
        ),
    )(x,
      wq, params["bq"], wkv, bkv, wo, params["bo"],
      params["ln1_g"], params["ln1_b"],
      w1, params["b1"], w2, params["b2"],
      params["ln2_g"], params["ln2_b"])


def reference(x, params, *, num_heads):
    """Pure-JAX f32 reference matching the PyTorch forward (eval mode)."""
    B, T, E = x.shape
    hd = E // num_heads
    q = x @ params["wq"] + params["bq"]
    k = x @ params["wk"] + params["bk"]
    v = x @ params["wv"] + params["bv"]
    q = q.reshape(B, T, num_heads, hd).transpose(0, 2, 1, 3)
    k = k.reshape(B, T, num_heads, hd).transpose(0, 2, 1, 3)
    v = v.reshape(B, T, num_heads, hd).transpose(0, 2, 1, 3)
    scores = jnp.einsum("bhqd,bhkd->bhqk", q, k) / math.sqrt(hd)
    p = jax.nn.softmax(scores, axis=-1)
    o = jnp.einsum("bhqk,bhkd->bhqd", p, v).transpose(0, 2, 1, 3).reshape(B, T, E)
    o = o @ params["wo"] + params["bo"]

    def ln(z, g, b, eps=1e-5):
        mu = jnp.mean(z, axis=-1, keepdims=True)
        var = jnp.mean((z - mu) ** 2, axis=-1, keepdims=True)
        return (z - mu) / jnp.sqrt(var + eps) * g + b

    x1 = ln(x + o, params["ln1_g"], params["ln1_b"])
    f = jnp.maximum(x1 @ params["w1"] + params["b1"], 0.0) @ params["w2"] + params["b2"]
    return ln(x1 + f, params["ln2_g"], params["ln2_b"])


if __name__ == "__main__":
    B, T, E, H, FFN = 2, 8, 32, 4, 64
    key = jax.random.PRNGKey(0)
    ks = jax.random.split(key, 10)

    def w(k, shape, scale=0.05):
        return (scale * jax.random.normal(k, shape)).astype(jnp.float32)

    params = {
        "wq": w(ks[0], (E, E)), "bq": w(ks[1], (1, E)),
        "wk": w(ks[2], (E, E)), "bk": w(ks[3], (1, E)),
        "wv": w(ks[4], (E, E)), "bv": w(ks[5], (1, E)),
        "wo": w(ks[6], (E, E)), "bo": w(ks[7], (1, E)),
        "ln1_g": jnp.ones((1, E), jnp.float32), "ln1_b": jnp.zeros((1, E), jnp.float32),
        "w1": w(ks[8], (E, FFN)), "b1": jnp.zeros((1, FFN), jnp.float32),
        "w2": w(ks[9], (FFN, E)), "b2": jnp.zeros((1, E), jnp.float32),
        "ln2_g": jnp.ones((1, E), jnp.float32), "ln2_b": jnp.zeros((1, E), jnp.float32),
    }

    x = jax.random.normal(jax.random.PRNGKey(42), (B, T, E), jnp.float32)

    out = transformer_block(x, params, num_heads=H)
    out = jax.block_until_ready(out)

    ref = reference(x, params, num_heads=H)
    assert out.shape == (B, T, E)
    # bf16 matmul inputs (f32 accumulation) + approx reciprocal => relaxed tolerance vs f32 reference.
    assert jnp.allclose(out, ref, atol=2e-2, rtol=2e-2), "mismatch vs reference"
    print("KERNEL_OK")
</pallas_src>

<mosaic_0001>
module attributes {stable_mosaic.version = 11 : i64} {
  func.func @transformer_block_kernel(%arg0: i32, %arg1: i32, %arg2: memref<1x8x32xf32, #tpu.memory_space<vmem>>, %arg3: memref<32x32xbf16, #tpu.memory_space<vmem>>, %arg4: memref<1x32xf32, #tpu.memory_space<vmem>>, %arg5: memref<32x64xbf16, #tpu.memory_space<vmem>>, %arg6: memref<1x64xf32, #tpu.memory_space<vmem>>, %arg7: memref<32x32xbf16, #tpu.memory_space<vmem>>, %arg8: memref<1x32xf32, #tpu.memory_space<vmem>>, %arg9: memref<1x32xf32, #tpu.memory_space<vmem>>, %arg10: memref<1x32xf32, #tpu.memory_space<vmem>>, %arg11: memref<32x64xbf16, #tpu.memory_space<vmem>>, %arg12: memref<1x64xf32, #tpu.memory_space<vmem>>, %arg13: memref<64x32xbf16, #tpu.memory_space<vmem>>, %arg14: memref<1x32xf32, #tpu.memory_space<vmem>>, %arg15: memref<1x32xf32, #tpu.memory_space<vmem>>, %arg16: memref<1x32xf32, #tpu.memory_space<vmem>>, %arg17: memref<1x8x32xf32, #tpu.memory_space<vmem>>) attributes {dimension_semantics = [#tpu.dimension_semantics<parallel>, #tpu.dimension_semantics<parallel>], iteration_bounds = array<i64: 2, 1>, scalar_prefetch = 0 : i64, scratch_operands = 0 : i64, tpu.core_type = #tpu.core_type<tc>, window_params = [{transform_indices = @transform_0, window_bounds = array<i64: 1, 8, 32>}, {pipeline_mode = #tpu.pipeline_mode<synchronous>, transform_indices = @transform_1, window_bounds = array<i64: 32, 32>}, {pipeline_mode = #tpu.pipeline_mode<synchronous>, transform_indices = @transform_2, window_bounds = array<i64: 1, 32>}, {pipeline_mode = #tpu.pipeline_mode<synchronous>, transform_indices = @transform_3, window_bounds = array<i64: 32, 64>}, {pipeline_mode = #tpu.pipeline_mode<synchronous>, transform_indices = @transform_4, window_bounds = array<i64: 1, 64>}, {pipeline_mode = #tpu.pipeline_mode<synchronous>, transform_indices = @transform_5, window_bounds = array<i64: 32, 32>}, {pipeline_mode = #tpu.pipeline_mode<synchronous>, transform_indices = @transform_6, window_bounds = array<i64: 1, 32>}, {pipeline_mode = #tpu.pipeline_mode<synchronous>, transform_indices = @transform_7, window_bounds = array<i64: 1, 32>}, {pipeline_mode = #tpu.pipeline_mode<synchronous>, transform_indices = @transform_8, window_bounds = array<i64: 1, 32>}, {pipeline_mode = #tpu.pipeline_mode<synchronous>, transform_indices = @transform_9, window_bounds = array<i64: 32, 64>}, {pipeline_mode = #tpu.pipeline_mode<synchronous>, transform_indices = @transform_10, window_bounds = array<i64: 1, 64>}, {pipeline_mode = #tpu.pipeline_mode<synchronous>, transform_indices = @transform_11, window_bounds = array<i64: 64, 32>}, {pipeline_mode = #tpu.pipeline_mode<synchronous>, transform_indices = @transform_12, window_bounds = array<i64: 1, 32>}, {pipeline_mode = #tpu.pipeline_mode<synchronous>, transform_indices = @transform_13, window_bounds = array<i64: 1, 32>}, {pipeline_mode = #tpu.pipeline_mode<synchronous>, transform_indices = @transform_14, window_bounds = array<i64: 1, 32>}, {transform_indices = @transform_15, window_bounds = array<i64: 1, 8, 32>}]} {
    %c8_i32 = arith.constant 8 : i32
    %0 = arith.muli %arg1, %c8_i32 : i32
    %1 = tpu.assume_multiple %0, 8 : i32
    %c0 = arith.constant 0 : index
    %c0_0 = arith.constant 0 : index
    %c0_1 = arith.constant 0 : index
    %2 = vector.load %arg2[%c0, %c0_0, %c0_1] : memref<1x8x32xf32, #tpu.memory_space<vmem>>, vector<1x8x32xf32>
    %3 = vector.shape_cast %2 : vector<1x8x32xf32> to vector<8x32xf32>
    %c0_2 = arith.constant 0 : index
    %4 = arith.index_cast %1 : i32 to index
    %c0_3 = arith.constant 0 : index
    %5 = vector.load %arg2[%c0_2, %4, %c0_3] : memref<1x8x32xf32, #tpu.memory_space<vmem>>, vector<1x8x32xf32>
    %6 = vector.shape_cast %5 : vector<1x8x32xf32> to vector<8x32xf32>
    %7 = arith.truncf %3 : vector<8x32xf32> to vector<8x32xbf16>
    %8 = arith.truncf %6 : vector<8x32xf32> to vector<8x32xbf16>
    %c0_4 = arith.constant 0 : index
    %c0_5 = arith.constant 0 : index
    %9 = vector.load %arg3[%c0_4, %c0_5] : memref<32x32xbf16, #tpu.memory_space<vmem>>, vector<32x32xbf16>
    %cst = arith.constant dense<0.000000e+00> : vector<8x32xf32>
    %10 = tpu.matmul %8, %9, %cst {dimension_numbers = #tpu.dot_dimension_numbers<[1], [0], [0], [1], [0, 0, 1, 1], [], []>} : vector<8x32xbf16>, vector<32x32xbf16>, vector<8x32xf32> -> vector<8x32xf32>
    %c0_6 = arith.constant 0 : index
    %c0_7 = arith.constant 0 : index
    %11 = vector.load %arg4[%c0_6, %c0_7] : memref<1x32xf32, #tpu.memory_space<vmem>>, vector<1x32xf32>
    %12 = vector.broadcast %11 : vector<1x32xf32> to vector<8x32xf32>
    %13 = arith.addf %10, %12 : vector<8x32xf32>
    %c0_8 = arith.constant 0 : index
    %c0_9 = arith.constant 0 : index
    %14 = vector.load %arg5[%c0_8, %c0_9] : memref<32x64xbf16, #tpu.memory_space<vmem>>, vector<32x64xbf16>
    %cst_10 = arith.constant dense<0.000000e+00> : vector<8x64xf32>
    %15 = tpu.matmul %7, %14, %cst_10 {dimension_numbers = #tpu.dot_dimension_numbers<[1], [0], [0], [1], [0, 0, 1, 1], [], []>} : vector<8x32xbf16>, vector<32x64xbf16>, vector<8x64xf32> -> vector<8x64xf32>
    %c0_11 = arith.constant 0 : index
    %c0_12 = arith.constant 0 : index
    %16 = vector.load %arg6[%c0_11, %c0_12] : memref<1x64xf32, #tpu.memory_space<vmem>>, vector<1x64xf32>
    %17 = vector.broadcast %16 : vector<1x64xf32> to vector<8x64xf32>
    %18 = arith.addf %15, %17 : vector<8x64xf32>
    %19 = vector.extract_strided_slice %18 {offsets = [0, 0], sizes = [8, 32], strides = [1, 1]} : vector<8x64xf32> to vector<8x32xf32>
    %20 = vector.extract_strided_slice %18 {offsets = [0, 32], sizes = [8, 32], strides = [1, 1]} : vector<8x64xf32> to vector<8x32xf32>
    %21 = vector.shape_cast %13 : vector<8x32xf32> to vector<8x4x8xf32>
    %22 = tpu.transpose %21, [1, 0, 2] : vector<8x4x8xf32> -> vector<4x8x8xf32>
    %23 = vector.shape_cast %19 : vector<8x32xf32> to vector<8x4x8xf32>
    %24 = tpu.transpose %23, [1, 0, 2] : vector<8x4x8xf32> -> vector<4x8x8xf32>
    %25 = vector.shape_cast %20 : vector<8x32xf32> to vector<8x4x8xf32>
    %26 = tpu.transpose %25, [1, 0, 2] : vector<8x4x8xf32> -> vector<4x8x8xf32>
    %27 = arith.truncf %22 : vector<4x8x8xf32> to vector<4x8x8xbf16>
    %28 = arith.truncf %24 : vector<4x8x8xf32> to vector<4x8x8xbf16>
    "tpu.trace_start"() <{level = 10 : i32, message = "htd,hsd->hts"}> : () -> ()
    %cst_13 = arith.constant dense<0.000000e+00> : vector<4x8x8xf32>
    %29 = tpu.matmul %27, %28, %cst_13 {dimension_numbers = #tpu.dot_dimension_numbers<[2], [2], [1], [1], [0, 0, 0, 1, 1, 1], [0], [0]>} : vector<4x8x8xbf16>, vector<4x8x8xbf16>, vector<4x8x8xf32> -> vector<4x8x8xf32>
    "tpu.trace_stop"() : () -> ()
    %cst_14 = arith.constant 0.353553385 : f32
    %30 = vector.broadcast %cst_14 : f32 to vector<4x8x8xf32>
    %31 = arith.mulf %29, %30 : vector<4x8x8xf32>
    %cst_15 = arith.constant dense<0xFF800000> : vector<4x8xf32>
    %32 = vector.multi_reduction <maximumf>, %31, %cst_15 [2] : vector<4x8x8xf32> to vector<4x8xf32>
    %33 = vector.shape_cast %32 : vector<4x8xf32> to vector<4x8x1xf32>
    %34 = vector.broadcast %33 : vector<4x8x1xf32> to vector<4x8x8xf32>
    %35 = arith.subf %31, %34 : vector<4x8x8xf32>
    %36 = math.exp %35 : vector<4x8x8xf32>
    %cst_16 = arith.constant dense<0.000000e+00> : vector<4x8xf32>
    %37 = vector.multi_reduction <add>, %36, %cst_16 [2] : vector<4x8x8xf32> to vector<4x8xf32>
    %38 = vector.shape_cast %37 : vector<4x8xf32> to vector<4x8x1xf32>
    %39 = tpu.reciprocal %38 {approx = true} : vector<4x8x1xf32> -> vector<4x8x1xf32>
    %40 = vector.broadcast %39 : vector<4x8x1xf32> to vector<4x8x8xf32>
    %41 = arith.mulf %36, %40 : vector<4x8x8xf32>
    %42 = arith.truncf %41 : vector<4x8x8xf32> to vector<4x8x8xbf16>
    %43 = arith.truncf %26 : vector<4x8x8xf32> to vector<4x8x8xbf16>
    "tpu.trace_start"() <{level = 10 : i32, message = "hts,hsd->htd"}> : () -> ()
    %cst_17 = arith.constant dense<0.000000e+00> : vector<4x8x8xf32>
    %44 = tpu.matmul %42, %43, %cst_17 {dimension_numbers = #tpu.dot_dimension_numbers<[2], [1], [1], [2], [0, 0, 0, 1, 1, 2], [0], [0]>} : vector<4x8x8xbf16>, vector<4x8x8xbf16>, vector<4x8x8xf32> -> vector<4x8x8xf32>
    "tpu.trace_stop"() : () -> ()
    %45 = tpu.transpose %44, [1, 0, 2] : vector<4x8x8xf32> -> vector<8x4x8xf32>
    %46 = vector.shape_cast %45 : vector<8x4x8xf32> to vector<8x32xf32>
    %47 = arith.truncf %46 : vector<8x32xf32> to vector<8x32xbf16>
    %c0_18 = arith.constant 0 : index
    %c0_19 = arith.constant 0 : index
    %48 = vector.load %arg7[%c0_18, %c0_19] : memref<32x32xbf16, #tpu.memory_space<vmem>>, vector<32x32xbf16>
    %cst_20 = arith.constant dense<0.000000e+00> : vector<8x32xf32>
    %49 = tpu.matmul %47, %48, %cst_20 {dimension_numbers = #tpu.dot_dimension_numbers<[1], [0], [0], [1], [0, 0, 1, 1], [], []>} : vector<8x32xbf16>, vector<32x32xbf16>, vector<8x32xf32> -> vector<8x32xf32>
    %c0_21 = arith.constant 0 : index
    %c0_22 = arith.constant 0 : index
    %50 = vector.load %arg8[%c0_21, %c0_22] : memref<1x32xf32, #tpu.memory_space<vmem>>, vector<1x32xf32>
    %51 = vector.broadcast %50 : vector<1x32xf32> to vector<8x32xf32>
    %52 = arith.addf %49, %51 : vector<8x32xf32>
    %53 = arith.addf %6, %52 : vector<8x32xf32>
    %c0_23 = arith.constant 0 : index
    %c0_24 = arith.constant 0 : index
    %54 = vector.load %arg9[%c0_23, %c0_24] : memref<1x32xf32, #tpu.memory_space<vmem>>, vector<1x32xf32>
    %c0_25 = arith.constant 0 : index
    %c0_26 = arith.constant 0 : index
    %55 = vector.load %arg10[%c0_25, %c0_26] : memref<1x32xf32, #tpu.memory_space<vmem>>, vector<1x32xf32>
    %cst_27 = arith.constant dense<0.000000e+00> : vector<8xf32>
    %56 = vector.multi_reduction <add>, %53, %cst_27 [1] : vector<8x32xf32> to vector<8xf32>
    %57 = vector.shape_cast %56 : vector<8xf32> to vector<8x1xf32>
    %cst_28 = arith.constant 3.200000e+01 : f32
    %58 = vector.broadcast %cst_28 : f32 to vector<8x1xf32>
    %59 = arith.divf %57, %58 : vector<8x1xf32>
    %60 = vector.broadcast %59 : vector<8x1xf32> to vector<8x32xf32>
    %61 = arith.subf %53, %60 : vector<8x32xf32>
    %62 = arith.mulf %61, %61 : vector<8x32xf32>
    %cst_29 = arith.constant dense<0.000000e+00> : vector<8xf32>
    %63 = vector.multi_reduction <add>, %62, %cst_29 [1] : vector<8x32xf32> to vector<8xf32>
    %64 = vector.shape_cast %63 : vector<8xf32> to vector<8x1xf32>
    %cst_30 = arith.constant 3.200000e+01 : f32
    %65 = vector.broadcast %cst_30 : f32 to vector<8x1xf32>
    %66 = arith.divf %64, %65 : vector<8x1xf32>
    %67 = vector.broadcast %59 : vector<8x1xf32> to vector<8x32xf32>
    %68 = arith.subf %53, %67 : vector<8x32xf32>
    %cst_31 = arith.constant 9.99999974E-6 : f32
    %69 = vector.broadcast %cst_31 : f32 to vector<8x1xf32>
    %70 = arith.addf %66, %69 : vector<8x1xf32>
    %71 = math.rsqrt %70 : vector<8x1xf32>
    %72 = vector.broadcast %71 : vector<8x1xf32> to vector<8x32xf32>
    %73 = arith.mulf %68, %72 : vector<8x32xf32>
    %74 = vector.broadcast %54 : vector<1x32xf32> to vector<8x32xf32>
    %75 = arith.mulf %73, %74 : vector<8x32xf32>
    %76 = vector.broadcast %55 : vector<1x32xf32> to vector<8x32xf32>
    %77 = arith.addf %75, %76 : vector<8x32xf32>
    %78 = arith.truncf %77 : vector<8x32xf32> to vector<8x32xbf16>
    %c0_32 = arith.constant 0 : index
    %c0_33 = arith.constant 0 : index
    %79 = vector.load %arg11[%c0_32, %c0_33] : memref<32x64xbf16, #tpu.memory_space<vmem>>, vector<32x64xbf16>
    %cst_34 = arith.constant dense<0.000000e+00> : vector<8x64xf32>
    %80 = tpu.matmul %78, %79, %cst_34 {dimension_numbers = #tpu.dot_dimension_numbers<[1], [0], [0], [1], [0, 0, 1, 1], [], []>} : vector<8x32xbf16>, vector<32x64xbf16>, vector<8x64xf32> -> vector<8x64xf32>
    %c0_35 = arith.constant 0 : index
    %c0_36 = arith.constant 0 : index
    %81 = vector.load %arg12[%c0_35, %c0_36] : memref<1x64xf32, #tpu.memory_space<vmem>>, vector<1x64xf32>
    %82 = vector.broadcast %81 : vector<1x64xf32> to vector<8x64xf32>
    %83 = arith.addf %80, %82 : vector<8x64xf32>
    %cst_37 = arith.constant 0.000000e+00 : f32
    %84 = vector.broadcast %cst_37 : f32 to vector<8x64xf32>
    %85 = arith.maximumf %83, %84 : vector<8x64xf32>
    %86 = arith.truncf %85 : vector<8x64xf32> to vector<8x64xbf16>
    %c0_38 = arith.constant 0 : index
    %c0_39 = arith.constant 0 : index
    %87 = vector.load %arg13[%c0_38, %c0_39] : memref<64x32xbf16, #tpu.memory_space<vmem>>, vector<64x32xbf16>
    %cst_40 = arith.constant dense<0.000000e+00> : vector<8x32xf32>
    %88 = tpu.matmul %86, %87, %cst_40 {dimension_numbers = #tpu.dot_dimension_numbers<[1], [0], [0], [1], [0, 0, 1, 1], [], []>} : vector<8x64xbf16>, vector<64x32xbf16>, vector<8x32xf32> -> vector<8x32xf32>
    %c0_41 = arith.constant 0 : index
    %c0_42 = arith.constant 0 : index
    %89 = vector.load %arg14[%c0_41, %c0_42] : memref<1x32xf32, #tpu.memory_space<vmem>>, vector<1x32xf32>
    %90 = vector.broadcast %89 : vector<1x32xf32> to vector<8x32xf32>
    %91 = arith.addf %88, %90 : vector<8x32xf32>
    %92 = arith.addf %77, %91 : vector<8x32xf32>
    %c0_43 = arith.constant 0 : index
    %c0_44 = arith.constant 0 : index
    %93 = vector.load %arg15[%c0_43, %c0_44] : memref<1x32xf32, #tpu.memory_space<vmem>>, vector<1x32xf32>
    %c0_45 = arith.constant 0 : index
    %c0_46 = arith.constant 0 : index
    %94 = vector.load %arg16[%c0_45, %c0_46] : memref<1x32xf32, #tpu.memory_space<vmem>>, vector<1x32xf32>
    %cst_47 = arith.constant dense<0.000000e+00> : vector<8xf32>
    %95 = vector.multi_reduction <add>, %92, %cst_47 [1] : vector<8x32xf32> to vector<8xf32>
    %96 = vector.shape_cast %95 : vector<8xf32> to vector<8x1xf32>
    %cst_48 = arith.constant 3.200000e+01 : f32
    %97 = vector.broadcast %cst_48 : f32 to vector<8x1xf32>
    %98 = arith.divf %96, %97 : vector<8x1xf32>
    %99 = vector.broadcast %98 : vector<8x1xf32> to vector<8x32xf32>
    %100 = arith.subf %92, %99 : vector<8x32xf32>
    %101 = arith.mulf %100, %100 : vector<8x32xf32>
    %cst_49 = arith.constant dense<0.000000e+00> : vector<8xf32>
    %102 = vector.multi_reduction <add>, %101, %cst_49 [1] : vector<8x32xf32> to vector<8xf32>
    %103 = vector.shape_cast %102 : vector<8xf32> to vector<8x1xf32>
    %cst_50 = arith.constant 3.200000e+01 : f32
    %104 = vector.broadcast %cst_50 : f32 to vector<8x1xf32>
    %105 = arith.divf %103, %104 : vector<8x1xf32>
    %106 = vector.broadcast %98 : vector<8x1xf32> to vector<8x32xf32>
    %107 = arith.subf %92, %106 : vector<8x32xf32>
    %cst_51 = arith.constant 9.99999974E-6 : f32
    %108 = vector.broadcast %cst_51 : f32 to vector<8x1xf32>
    %109 = arith.addf %105, %108 : vector<8x1xf32>
    %110 = math.rsqrt %109 : vector<8x1xf32>
    %111 = vector.broadcast %110 : vector<8x1xf32> to vector<8x32xf32>
    %112 = arith.mulf %107, %111 : vector<8x32xf32>
    %113 = vector.broadcast %93 : vector<1x32xf32> to vector<8x32xf32>
    %114 = arith.mulf %112, %113 : vector<8x32xf32>
    %115 = vector.broadcast %94 : vector<1x32xf32> to vector<8x32xf32>
    %116 = arith.addf %114, %115 : vector<8x32xf32>
    %c0_52 = arith.constant 0 : index
    %c0_53 = arith.constant 0 : index
    %c0_54 = arith.constant 0 : index
    %117 = vector.load %arg17[%c0_52, %c0_53, %c0_54] : memref<1x8x32xf32, #tpu.memory_space<vmem>>, vector<1x8x32xf32>
    %118 = vector.shape_cast %117 : vector<1x8x32xf32> to vector<8x32xf32>
    %119 = vector.shape_cast %116 : vector<8x32xf32> to vector<1x8x32xf32>
    tpu.vector_store %arg17[%c0_52, %c0_53, %c0_54], %119 {strides = array<i32>} : memref<1x8x32xf32, #tpu.memory_space<vmem>>, vector<1x8x32xf32>,
    return
  }
  func.func @transform_0(%arg0: i32, %arg1: i32) -> (i32, i32, i32) {
    %c0_i32 = arith.constant 0 : i32
    %c0_i32_0 = arith.constant 0 : i32
    %c0_i32_1 = arith.constant 0 : i32
    return %arg0, %c0_i32, %c0_i32_0 : i32, i32, i32
  }
  func.func @transform_1(%arg0: i32, %arg1: i32) -> (i32, i32) {
    %c0_i32 = arith.constant 0 : i32
    %c0_i32_0 = arith.constant 0 : i32
    %c0_i32_1 = arith.constant 0 : i32
    return %c0_i32, %c0_i32_0 : i32, i32
  }
  func.func @transform_2(%arg0: i32, %arg1: i32) -> (i32, i32) {
    %c0_i32 = arith.constant 0 : i32
    %c0_i32_0 = arith.constant 0 : i32
    %c0_i32_1 = arith.constant 0 : i32
    return %c0_i32, %c0_i32_0 : i32, i32
  }
  func.func @transform_3(%arg0: i32, %arg1: i32) -> (i32, i32) {
    %c0_i32 = arith.constant 0 : i32
    %c0_i32_0 = arith.constant 0 : i32
    %c0_i32_1 = arith.constant 0 : i32
    return %c0_i32, %c0_i32_0 : i32, i32
  }
  func.func @transform_4(%arg0: i32, %arg1: i32) -> (i32, i32) {
    %c0_i32 = arith.constant 0 : i32
    %c0_i32_0 = arith.constant 0 : i32
    %c0_i32_1 = arith.constant 0 : i32
    return %c0_i32, %c0_i32_0 : i32, i32
  }
  func.func @transform_5(%arg0: i32, %arg1: i32) -> (i32, i32) {
    %c0_i32 = arith.constant 0 : i32
    %c0_i32_0 = arith.constant 0 : i32
    %c0_i32_1 = arith.constant 0 : i32
    return %c0_i32, %c0_i32_0 : i32, i32
  }
  func.func @transform_6(%arg0: i32, %arg1: i32) -> (i32, i32) {
    %c0_i32 = arith.constant 0 : i32
    %c0_i32_0 = arith.constant 0 : i32
    %c0_i32_1 = arith.constant 0 : i32
    return %c0_i32, %c0_i32_0 : i32, i32
  }
  func.func @transform_7(%arg0: i32, %arg1: i32) -> (i32, i32) {
    %c0_i32 = arith.constant 0 : i32
    %c0_i32_0 = arith.constant 0 : i32
    %c0_i32_1 = arith.constant 0 : i32
    return %c0_i32, %c0_i32_0 : i32, i32
  }
  func.func @transform_8(%arg0: i32, %arg1: i32) -> (i32, i32) {
    %c0_i32 = arith.constant 0 : i32
    %c0_i32_0 = arith.constant 0 : i32
    %c0_i32_1 = arith.constant 0 : i32
    return %c0_i32, %c0_i32_0 : i32, i32
  }
  func.func @transform_9(%arg0: i32, %arg1: i32) -> (i32, i32) {
    %c0_i32 = arith.constant 0 : i32
    %c0_i32_0 = arith.constant 0 : i32
    %c0_i32_1 = arith.constant 0 : i32
    return %c0_i32, %c0_i32_0 : i32, i32
  }
  func.func @transform_10(%arg0: i32, %arg1: i32) -> (i32, i32) {
    %c0_i32 = arith.constant 0 : i32
    %c0_i32_0 = arith.constant 0 : i32
    %c0_i32_1 = arith.constant 0 : i32
    return %c0_i32, %c0_i32_0 : i32, i32
  }
  func.func @transform_11(%arg0: i32, %arg1: i32) -> (i32, i32) {
    %c0_i32 = arith.constant 0 : i32
    %c0_i32_0 = arith.constant 0 : i32
    %c0_i32_1 = arith.constant 0 : i32
    return %c0_i32, %c0_i32_0 : i32, i32
  }
  func.func @transform_12(%arg0: i32, %arg1: i32) -> (i32, i32) {
    %c0_i32 = arith.constant 0 : i32
    %c0_i32_0 = arith.constant 0 : i32
    %c0_i32_1 = arith.constant 0 : i32
    return %c0_i32, %c0_i32_0 : i32, i32
  }
  func.func @transform_13(%arg0: i32, %arg1: i32) -> (i32, i32) {
    %c0_i32 = arith.constant 0 : i32
    %c0_i32_0 = arith.constant 0 : i32
    %c0_i32_1 = arith.constant 0 : i32
    return %c0_i32, %c0_i32_0 : i32, i32
  }
  func.func @transform_14(%arg0: i32, %arg1: i32) -> (i32, i32) {
    %c0_i32 = arith.constant 0 : i32
    %c0_i32_0 = arith.constant 0 : i32
    %c0_i32_1 = arith.constant 0 : i32
    return %c0_i32, %c0_i32_0 : i32, i32
  }
  func.func @transform_15(%arg0: i32, %arg1: i32) -> (i32, i32, i32) {
    %c0_i32 = arith.constant 0 : i32
    %c0_i32_0 = arith.constant 0 : i32
    return %arg0, %arg1, %c0_i32 : i32, i32, i32
  }
}

</mosaic_0001>

<llo_original>
// kernel: tpu_custom_call.1
$region0: #{tpu_custom_call.1}
  #allocation0 [shape = 'u32[]', space=smem, size = 0x4, offset = 0x4, fixed_abs, tag = 'smem constant byte address 0x4 - core index']
  #allocation1 [shape = 'u32[72,128]{1,0:T(1,128)}', space=vmem, size = 0x9000, scoped, tag = 'internal scratch']
  %s0 = inlined_call_operand.vmem [shape: f32[2,8,32], index: 0, kind: input, shape index: {}]
  %s1 = inlined_call_operand.vmem [shape: bf16[32,32], index: 1, kind: input, shape index: {}]
  %s2 = inlined_call_operand.vmem [shape: f32[1,32], index: 2, kind: input, shape index: {}]
  %s3 = inlined_call_operand.vmem [shape: bf16[32,64], index: 3, kind: input, shape index: {}]
  %s4 = inlined_call_operand.vmem [shape: f32[1,64], index: 4, kind: input, shape index: {}]
  %s5 = inlined_call_operand.hbm [shape: bf16[32,32], index: 5, kind: input, shape index: {}]
  %s6 = inlined_call_operand.vmem [shape: f32[1,32], index: 6, kind: input, shape index: {}]
  %s7 = inlined_call_operand.vmem [shape: f32[1,32], index: 7, kind: input, shape index: {}]
  %s8 = inlined_call_operand.vmem [shape: f32[1,32], index: 8, kind: input, shape index: {}]
  %s9 = inlined_call_operand.hbm [shape: bf16[32,64], index: 9, kind: input, shape index: {}]
  %s10 = inlined_call_operand.vmem [shape: f32[1,64], index: 10, kind: input, shape index: {}]
  %s11 = inlined_call_operand.vmem [shape: bf16[64,32], index: 11, kind: input, shape index: {}]
  %s12 = inlined_call_operand.vmem [shape: f32[1,32], index: 12, kind: input, shape index: {}]
  %s13 = inlined_call_operand.vmem [shape: f32[1,32], index: 13, kind: input, shape index: {}]
  %s14 = inlined_call_operand.vmem [shape: f32[1,32], index: 14, kind: input, shape index: {}]
  %s15 = inlined_call_operand.hbm [shape: f32[2,8,32], index: 15, kind: output, shape index: {}]
  %s16 = sld [smem:[#allocation0]]
  $region101: #{tpu_custom_call.1} parent=0
    _
  %s18 = ssub.s32 1, %s16
  %s19 = scalar_select 0, %s18, %s16
  $region1: #{tpu_custom_call.1} parent=0
    #allocation2 [shape = 'u8[8192]{0}', space=vmem, size = 0x2000, scoped, tag = 'input window, operand 5, single buffered']
    #allocation3 [shape = 's32[2]{0}', space=sflag, size = 0x8, scoped, tag = 'scoped memory for tpu_custom_call.1']
    #allocation4 [shape = 's32[2]{0}', space=sflag, size = 0x8, scoped, tag = 'scoped memory for tpu_custom_call.1']
    #allocation5 [shape = 'u8[8192]{0}', space=vmem, size = 0x2000, scoped, tag = 'input window, operand 9, single buffered']
    #allocation6 [shape = 's32[1]{0}', space=sflag, size = 0x4, scoped, tag = 'scoped memory for tpu_custom_call.1']
    #allocation7 [shape = 'u8[8192]{0}', space=vmem, size = 0x2000, scoped, tag = 'output window, operand 0']
    %20 = vsyncpa [#allocation3], 0
    %21 = vsyncpa [#allocation6], 0
    %22 = vsyncpa [#allocation4], 0
    %s23 = scalar_lea.sflag [#allocation4], 1
    %24 = vsyncpa %s23, 0
    loop: start=0, step=1, limit=4
    $region2: #{tpu_custom_call.1} parent=1 // loop_pre_header
      _
    $region3: #{tpu_custom_call.1} parent=1 // loop_header
      %s26 = sphi 0, %s30
      %p27 = scmp.ge.s32.totalorder %s26, 4
      %s33 = sphi 0, %s45
      %s34 = sphi 0, %s41
      %s35 = sphi 0, %s33
      %s36 = sphi 0, %s34
      %s37 = sphi 0, %s35
      %s38 = sphi 0, %s36
      %s48 = sphi 0, %s50
      %s51 = sphi 0, %s48
      %s52 = sphi 0, %s51
      %s68 = sphi 0, %s52
      %s72 = sphi 0, %s72
      %s74 = sphi 0, %s72
      %s75 = sphi 0, %s74
      %s89 = sphi 0, %s75
      %s93 = sphi 0, %s93
      %s95 = sphi 0, %s93
      %s96 = sphi 0, %s95
      %s110 = sphi 0, %s96
      %s114 = sphi 0, %s114
      %s116 = sphi 0, %s114
      %s117 = sphi 0, %s116
      %s131 = sphi 0, %s117
      %s135 = sphi 0, %s135
      %s137 = sphi 0, %s135
      %s138 = sphi 0, %s137
      %s152 = sphi 0, %s138
      %s156 = sphi 0, %s156
      %s158 = sphi 0, %s156
      %s159 = sphi 0, %s158
      %s173 = sphi 0, %s159
      %s177 = sphi 0, %s177
      %s179 = sphi 0, %s177
      %s180 = sphi 0, %s179
      %s194 = sphi 0, %s180
      %s198 = sphi 0, %s198
      %s200 = sphi 0, %s198
      %s201 = sphi 0, %s200
      %s215 = sphi 0, %s201
      %s219 = sphi 0, %s219
      %s221 = sphi 0, %s219
      %s222 = sphi 0, %s221
      %s236 = sphi 0, %s222
      %s240 = sphi 0, %s240
      %s242 = sphi 0, %s240
      %s243 = sphi 0, %s242
      %s257 = sphi 0, %s243
      %s261 = sphi 0, %s261
      %s263 = sphi 0, %s261
      %s264 = sphi 0, %s263
      %s278 = sphi 0, %s264
      %s282 = sphi 0, %s282
      %s284 = sphi 0, %s282
      %s285 = sphi 0, %s284
      %s299 = sphi 0, %s285
      %s303 = sphi 0, %s303
      %s305 = sphi 0, %s303
      %s306 = sphi 0, %s305
      %s320 = sphi 0, %s306
      %s324 = sphi 0, %s324
      %s326 = sphi 0, %s324
      %s327 = sphi 0, %s326
      %s341 = sphi 0, %s327
      %s345 = sphi 0, %s345
      %s347 = sphi 0, %s345
      %s348 = sphi 0, %s347
      %s362 = sphi 0, %s348
      %s370 = sphi 0, %s372
      %s373 = sphi 0, %s370
      %s374 = sphi 0, %s373
      %s390 = sphi 0, %s374
    $region4: #{tpu_custom_call.1} parent=1 // loop_header_branch
      %29 = sbr.rel (%p27) target = $region8
    $region5: #{tpu_custom_call.1} parent=1 // loop_body
      %s31 = ssub.s32 %s26, 1
      %s32 = ssub.s32 %s26, 2
      %s39 = sadd.s32 1, %s34
      %p40 = scmp.ge.s32.totalorder %s39, 1
      %s41 = scalar_select %p40, 0, %s39
      %s42 = sadd.s32 1, %s33
      %s43 = scalar_select %p40, %s42, %s33
      %p44 = scmp.ge.s32.totalorder %s43, 2
      %s45 = scalar_select %p44, 0, %s43
      %s46 = ssub.s32 %s33, %s45
      %p47 = scmp.eq.s32.totalorder %s46, 0
      %s49 = sadd.s32 %s48, 1
      %s50 = scalar_select %p47, %s48, %s49
      %p53 = pneg %p47
      %p54 = scmp.eq.s32.totalorder %s26, 1
      %p55 = por %p53, %p54
      %p56 = scmp.ne.s32.totalorder %s48, %s51
      %p57 = scmp.eq.s32.totalorder %s26, 0
      %p58 = por %p56, %p57
      %p59 = scmp.ne.s32.totalorder %s48, %s51
      %p60 = scmp.eq.s32.totalorder %s31, 1
      %p61 = por %p59, %p60
      %p62 = scmp.ne.s32.totalorder %s51, %s52
      %p63 = scmp.eq.s32.totalorder %s31, 0
      %p64 = por %p62, %p63
      %p65 = scmp.ne.s32.totalorder %s51, %s52
      %p66 = scmp.eq.s32.totalorder %s32, 1
      %p67 = por %p65, %p66
      %p69 = scmp.ne.s32.totalorder %s52, %s68
      %p70 = scmp.eq.s32.totalorder %s32, 0
      %p71 = por %p69, %p70
      %s73 = sadd.s32 %s72, 1
      %p76 = scmp.eq.s32.totalorder %s26, 1
      %p77 = scmp.ne.s32.totalorder %s72, %s74
      %p78 = scmp.eq.s32.totalorder %s26, 0
      %p79 = por %p77, %p78
      %p80 = scmp.ne.s32.totalorder %s72, %s74
      %p81 = scmp.eq.s32.totalorder %s31, 1
      %p82 = por %p80, %p81
      %p83 = scmp.ne.s32.totalorder %s74, %s75
      %p84 = scmp.eq.s32.totalorder %s31, 0
      %p85 = por %p83, %p84
      %p86 = scmp.ne.s32.totalorder %s74, %s75
      %p87 = scmp.eq.s32.totalorder %s32, 1
      %p88 = por %p86, %p87
      %p90 = scmp.ne.s32.totalorder %s75, %s89
      %p91 = scmp.eq.s32.totalorder %s32, 0
      %p92 = por %p90, %p91
      %s94 = sadd.s32 %s93, 1
      %p97 = scmp.eq.s32.totalorder %s26, 1
      %p98 = scmp.ne.s32.totalorder %s93, %s95
      %p99 = scmp.eq.s32.totalorder %s26, 0
      %p100 = por %p98, %p99
      %p101 = scmp.ne.s32.totalorder %s93, %s95
      %p102 = scmp.eq.s32.totalorder %s31, 1
      %p103 = por %p101, %p102
      %p104 = scmp.ne.s32.totalorder %s95, %s96
      %p105 = scmp.eq.s32.totalorder %s31, 0
      %p106 = por %p104, %p105
      %p107 = scmp.ne.s32.totalorder %s95, %s96
      %p108 = scmp.eq.s32.totalorder %s32, 1
      %p109 = por %p107, %p108
      %p111 = scmp.ne.s32.totalorder %s96, %s110
      %p112 = scmp.eq.s32.totalorder %s32, 0
      %p113 = por %p111, %p112
      %s115 = sadd.s32 %s114, 1
      %p118 = scmp.eq.s32.totalorder %s26, 1
      %p119 = scmp.ne.s32.totalorder %s114, %s116
      %p120 = scmp.eq.s32.totalorder %s26, 0
      %p121 = por %p119, %p120
      %p122 = scmp.ne.s32.totalorder %s114, %s116
      %p123 = scmp.eq.s32.totalorder %s31, 1
      %p124 = por %p122, %p123
      %p125 = scmp.ne.s32.totalorder %s116, %s117
      %p126 = scmp.eq.s32.totalorder %s31, 0
      %p127 = por %p125, %p126
      %p128 = scmp.ne.s32.totalorder %s116, %s117
      %p129 = scmp.eq.s32.totalorder %s32, 1
      %p130 = por %p128, %p129
      %p132 = scmp.ne.s32.totalorder %s117, %s131
      %p133 = scmp.eq.s32.totalorder %s32, 0
      %p134 = por %p132, %p133
      %s136 = sadd.s32 %s135, 1
      %p139 = scmp.eq.s32.totalorder %s26, 1
      %p140 = scmp.ne.s32.totalorder %s135, %s137
      %p141 = scmp.eq.s32.totalorder %s26, 0
      %p142 = por %p140, %p141
      %p143 = scmp.ne.s32.totalorder %s135, %s137
      %p144 = scmp.eq.s32.totalorder %s31, 1
      %p145 = por %p143, %p144
      %p146 = scmp.ne.s32.totalorder %s137, %s138
      %p147 = scmp.eq.s32.totalorder %s31, 0
      %p148 = por %p146, %p147
      %p149 = scmp.ne.s32.totalorder %s137, %s138
      %p150 = scmp.eq.s32.totalorder %s32, 1
      %p151 = por %p149, %p150
      %p153 = scmp.ne.s32.totalorder %s138, %s152
      %p154 = scmp.eq.s32.totalorder %s32, 0
      %p155 = por %p153, %p154
      %s157 = sadd.s32 %s156, 1
      %p160 = scmp.eq.s32.totalorder %s26, 1
      %p161 = scmp.ne.s32.totalorder %s156, %s158
      %p162 = scmp.eq.s32.totalorder %s26, 0
      %p163 = por %p161, %p162
      %p164 = scmp.ne.s32.totalorder %s156, %s158
      %p165 = scmp.eq.s32.totalorder %s31, 1
      %p166 = por %p164, %p165
      %p167 = scmp.ne.s32.totalorder %s158, %s159
      %p168 = scmp.eq.s32.totalorder %s31, 0
      %p169 = por %p167, %p168
      %p170 = scmp.ne.s32.totalorder %s158, %s159
      %p171 = scmp.eq.s32.totalorder %s32, 1
      %p172 = por %p170, %p171
      %p174 = scmp.ne.s32.totalorder %s159, %s173
      %p175 = scmp.eq.s32.totalorder %s32, 0
      %p176 = por %p174, %p175
      %s178 = sadd.s32 %s177, 1
      %p181 = scmp.eq.s32.totalorder %s26, 1
      %p182 = scmp.ne.s32.totalorder %s177, %s179
      %p183 = scmp.eq.s32.totalorder %s26, 0
      %p184 = por %p182, %p183
      %p185 = scmp.ne.s32.totalorder %s177, %s179
      %p186 = scmp.eq.s32.totalorder %s31, 1
      %p187 = por %p185, %p186
      %p188 = scmp.ne.s32.totalorder %s179, %s180
      %p189 = scmp.eq.s32.totalorder %s31, 0
      %p190 = por %p188, %p189
      %p191 = scmp.ne.s32.totalorder %s179, %s180
      %p192 = scmp.eq.s32.totalorder %s32, 1
      %p193 = por %p191, %p192
      %p195 = scmp.ne.s32.totalorder %s180, %s194
      %p196 = scmp.eq.s32.totalorder %s32, 0
      %p197 = por %p195, %p196
      %s199 = sadd.s32 %s198, 1
      %p202 = scmp.eq.s32.totalorder %s26, 1
      %p203 = scmp.ne.s32.totalorder %s198, %s200
      %p204 = scmp.eq.s32.totalorder %s26, 0
      %p205 = por %p203, %p204
      %p206 = scmp.ne.s32.totalorder %s198, %s200
      %p207 = scmp.eq.s32.totalorder %s31, 1
      %p208 = por %p206, %p207
      %p209 = scmp.ne.s32.totalorder %s200, %s201
      %p210 = scmp.eq.s32.totalorder %s31, 0
      %p211 = por %p209, %p210
      %p212 = scmp.ne.s32.totalorder %s200, %s201
      %p213 = scmp.eq.s32.totalorder %s32, 1
      %p214 = por %p212, %p213
      %p216 = scmp.ne.s32.totalorder %s201, %s215
      %p217 = scmp.eq.s32.totalorder %s32, 0
      %p218 = por %p216, %p217
      %s220 = sadd.s32 %s219, 1
      %p223 = scmp.eq.s32.totalorder %s26, 1
      %p224 = scmp.ne.s32.totalorder %s219, %s221
      %p225 = scmp.eq.s32.totalorder %s26, 0
      %p226 = por %p224, %p225
      %p227 = scmp.ne.s32.totalorder %s219, %s221
      %p228 = scmp.eq.s32.totalorder %s31, 1
      %p229 = por %p227, %p228
      %p230 = scmp.ne.s32.totalorder %s221, %s222
      %p231 = scmp.eq.s32.totalorder %s31, 0
      %p232 = por %p230, %p231
      %p233 = scmp.ne.s32.totalorder %s221, %s222
      %p234 = scmp.eq.s32.totalorder %s32, 1
      %p235 = por %p233, %p234
      %p237 = scmp.ne.s32.totalorder %s222, %s236
      %p238 = scmp.eq.s32.totalorder %s32, 0
      %p239 = por %p237, %p238
      %s241 = sadd.s32 %s240, 1
      %p244 = scmp.eq.s32.totalorder %s26, 1
      %p245 = scmp.ne.s32.totalorder %s240, %s242
      %p246 = scmp.eq.s32.totalorder %s26, 0
      %p247 = por %p245, %p246
      %p248 = scmp.ne.s32.totalorder %s240, %s242
      %p249 = scmp.eq.s32.totalorder %s31, 1
      %p250 = por %p248, %p249
      %p251 = scmp.ne.s32.totalorder %s242, %s243
      %p252 = scmp.eq.s32.totalorder %s31, 0
      %p253 = por %p251, %p252
      %p254 = scmp.ne.s32.totalorder %s242, %s243
      %p255 = scmp.eq.s32.totalorder %s32, 1
      %p256 = por %p254, %p255
      %p258 = scmp.ne.s32.totalorder %s243, %s257
      %p259 = scmp.eq.s32.totalorder %s32, 0
      %p260 = por %p258, %p259
      %s262 = sadd.s32 %s261, 1
      %p265 = scmp.eq.s32.totalorder %s26, 1
      %p266 = scmp.ne.s32.totalorder %s261, %s263
      %p267 = scmp.eq.s32.totalorder %s26, 0
      %p268 = por %p266, %p267
      %p269 = scmp.ne.s32.totalorder %s261, %s263
      %p270 = scmp.eq.s32.totalorder %s31, 1
      %p271 = por %p269, %p270
      %p272 = scmp.ne.s32.totalorder %s263, %s264
      %p273 = scmp.eq.s32.totalorder %s31, 0
      %p274 = por %p272, %p273
      %p275 = scmp.ne.s32.totalorder %s263, %s264
      %p276 = scmp.eq.s32.totalorder %s32, 1
      %p277 = por %p275, %p276
      %p279 = scmp.ne.s32.totalorder %s264, %s278
      %p280 = scmp.eq.s32.totalorder %s32, 0
      %p281 = por %p279, %p280
      %s283 = sadd.s32 %s282, 1
      %p286 = scmp.eq.s32.totalorder %s26, 1
      %p287 = scmp.ne.s32.totalorder %s282, %s284
      %p288 = scmp.eq.s32.totalorder %s26, 0
      %p289 = por %p287, %p288
      %p290 = scmp.ne.s32.totalorder %s282, %s284
      %p291 = scmp.eq.s32.totalorder %s31, 1
      %p292 = por %p290, %p291
      %p293 = scmp.ne.s32.totalorder %s284, %s285
      %p294 = scmp.eq.s32.totalorder %s31, 0
      %p295 = por %p293, %p294
      %p296 = scmp.ne.s32.totalorder %s284, %s285
      %p297 = scmp.eq.s32.totalorder %s32, 1
      %p298 = por %p296, %p297
      %p300 = scmp.ne.s32.totalorder %s285, %s299
      %p301 = scmp.eq.s32.totalorder %s32, 0
      %p302 = por %p300, %p301
      %s304 = sadd.s32 %s303, 1
      %p307 = scmp.eq.s32.totalorder %s26, 1
      %p308 = scmp.ne.s32.totalorder %s303, %s305
      %p309 = scmp.eq.s32.totalorder %s26, 0
      %p310 = por %p308, %p309
      %p311 = scmp.ne.s32.totalorder %s303, %s305
      %p312 = scmp.eq.s32.totalorder %s31, 1
      %p313 = por %p311, %p312
      %p314 = scmp.ne.s32.totalorder %s305, %s306
      %p315 = scmp.eq.s32.totalorder %s31, 0
      %p316 = por %p314, %p315
      %p317 = scmp.ne.s32.totalorder %s305, %s306
      %p318 = scmp.eq.s32.totalorder %s32, 1
      %p319 = por %p317, %p318
      %p321 = scmp.ne.s32.totalorder %s306, %s320
      %p322 = scmp.eq.s32.totalorder %s32, 0
      %p323 = por %p321, %p322
      %s325 = sadd.s32 %s324, 1
      %p328 = scmp.eq.s32.totalorder %s26, 1
      %p329 = scmp.ne.s32.totalorder %s324, %s326
      %p330 = scmp.eq.s32.totalorder %s26, 0
      %p331 = por %p329, %p330
      %p332 = scmp.ne.s32.totalorder %s324, %s326
      %p333 = scmp.eq.s32.totalorder %s31, 1
      %p334 = por %p332, %p333
      %p335 = scmp.ne.s32.totalorder %s326, %s327
      %p336 = scmp.eq.s32.totalorder %s31, 0
      %p337 = por %p335, %p336
      %p338 = scmp.ne.s32.totalorder %s326, %s327
      %p339 = scmp.eq.s32.totalorder %s32, 1
      %p340 = por %p338, %p339
      %p342 = scmp.ne.s32.totalorder %s327, %s341
      %p343 = scmp.eq.s32.totalorder %s32, 0
      %p344 = por %p342, %p343
      %s346 = sadd.s32 %s345, 1
      %p349 = scmp.eq.s32.totalorder %s26, 1
      %p350 = scmp.ne.s32.totalorder %s345, %s347
      %p351 = scmp.eq.s32.totalorder %s26, 0
      %p352 = por %p350, %p351
      %p353 = scmp.ne.s32.totalorder %s345, %s347
      %p354 = scmp.eq.s32.totalorder %s31, 1
      %p355 = por %p353, %p354
      %p356 = scmp.ne.s32.totalorder %s347, %s348
      %p357 = scmp.eq.s32.totalorder %s31, 0
      %p358 = por %p356, %p357
      %p359 = scmp.ne.s32.totalorder %s347, %s348
      %p360 = scmp.eq.s32.totalorder %s32, 1
      %p361 = por %p359, %p360
      %p363 = scmp.ne.s32.totalorder %s348, %s362
      %p364 = scmp.eq.s32.totalorder %s32, 0
      %p365 = por %p363, %p364
      %s366 = ssub.s32 %s33, %s45
      %s367 = ssub.s32 %s34, %s41
      %s368 = sor.u32 %s366, %s367
      %p369 = scmp.eq.s32.totalorder %s368, 0
      %s371 = sadd.s32 %s370, 1
      %s372 = scalar_select %p369, %s370, %s371
      %p375 = pneg %p369
      %p376 = scmp.eq.s32.totalorder %s26, 1
      %p377 = por %p375, %p376
      %p378 = scmp.ne.s32.totalorder %s370, %s373
      %p379 = scmp.eq.s32.totalorder %s26, 0
      %p380 = por %p378, %p379
      %p381 = scmp.ne.s32.totalorder %s370, %s373
      %p382 = scmp.eq.s32.totalorder %s31, 1
      %p383 = por %p381, %p382
      %p384 = scmp.ne.s32.totalorder %s373, %s374
      %p385 = scmp.eq.s32.totalorder %s31, 0
      %p386 = por %p384, %p385
      %p387 = scmp.ne.s32.totalorder %s373, %s374
      %p388 = scmp.eq.s32.totalorder %s32, 1
      %p389 = por %p387, %p388
      %p391 = scmp.ne.s32.totalorder %s374, %s390
      %p392 = scmp.eq.s32.totalorder %s32, 0
      %p393 = por %p391, %p392
      %p394 = scmp.le.s32.totalorder 1, %s26
      %p395 = scmp.lt.s32.totalorder %s26, 3
      %p396 = pnand %p394, %p395
      %p397 = pneg %p396
      // Predicated region
      $region9: #{tpu_custom_call.1} parent=5 // pred_check
        _
      $region10: #{tpu_custom_call.1} parent=5 // pred_check_branch
        %399 = sbr.rel (%p396) target = $region12
      $region11: #{tpu_custom_call.1} parent=5 // pred_region
        %s400 = ssub.s32 %s26, 1
        // Predicated region
        $region13: #{tpu_custom_call.1} parent=11 // pred_check
          %p401 = pneg %p85
        $region14: #{tpu_custom_call.1} parent=11 // pred_check_branch
          %403 = sbr.rel (%p401) target = $region16
        $region15: #{tpu_custom_call.1} parent=11 // pred_region
          _
        $region16: #{tpu_custom_call.1} parent=11 // pred_fallthru
          _
        // Predicated region
        $region17: #{tpu_custom_call.1} parent=11 // pred_check
          %p404 = pneg %p106
        $region18: #{tpu_custom_call.1} parent=11 // pred_check_branch
          %406 = sbr.rel (%p404) target = $region20
        $region19: #{tpu_custom_call.1} parent=11 // pred_region
          _
        $region20: #{tpu_custom_call.1} parent=11 // pred_fallthru
          _
        // Predicated region
        $region21: #{tpu_custom_call.1} parent=11 // pred_check
          %p407 = pneg %p127
        $region22: #{tpu_custom_call.1} parent=11 // pred_check_branch
          %409 = sbr.rel (%p407) target = $region24
        $region23: #{tpu_custom_call.1} parent=11 // pred_region
          _
        $region24: #{tpu_custom_call.1} parent=11 // pred_fallthru
          _
        // Predicated region
        $region25: #{tpu_custom_call.1} parent=11 // pred_check
          %p410 = pneg %p148
        $region26: #{tpu_custom_call.1} parent=11 // pred_check_branch
          %412 = sbr.rel (%p410) target = $region28
        $region27: #{tpu_custom_call.1} parent=11 // pred_region
          _
        $region28: #{tpu_custom_call.1} parent=11 // pred_fallthru
          _
        // Predicated region
        $region29: #{tpu_custom_call.1} parent=11 // pred_check
          %p413 = pneg %p169
        $region30: #{tpu_custom_call.1} parent=11 // pred_check_branch
          %415 = sbr.rel (%p413) target = $region32
        $region31: #{tpu_custom_call.1} parent=11 // pred_region
          %417 = vsyncadd [#allocation3], 0
          %s418 = sshll.u32 %s5, 4
          %s419 = int_to_ptr.hbm [resolvable:$true] %s418
          %s420 = sshll.u32 [#allocation2], 4
          %s421 = int_to_ptr.vmem [resolvable:$true] %s420
          %426 = dma.hbm_to_vmem [thread:$0]  %s419, 256, %s421, [#allocation3], 64, 64, 4
        $region32: #{tpu_custom_call.1} parent=11 // pred_fallthru
          _
        // Predicated region
        $region33: #{tpu_custom_call.1} parent=11 // pred_check
          %p427 = pneg %p190
        $region34: #{tpu_custom_call.1} parent=11 // pred_check_branch
          %429 = sbr.rel (%p427) target = $region36
        $region35: #{tpu_custom_call.1} parent=11 // pred_region
          _
        $region36: #{tpu_custom_call.1} parent=11 // pred_fallthru
          _
        // Predicated region
        $region37: #{tpu_custom_call.1} parent=11 // pred_check
          %p430 = pneg %p211
        $region38: #{tpu_custom_call.1} parent=11 // pred_check_branch
          %432 = sbr.rel (%p430) target = $region40
        $region39: #{tpu_custom_call.1} parent=11 // pred_region
          _
        $region40: #{tpu_custom_call.1} parent=11 // pred_fallthru
          _
        // Predicated region
        $region41: #{tpu_custom_call.1} parent=11 // pred_check
          %p433 = pneg %p232
        $region42: #{tpu_custom_call.1} parent=11 // pred_check_branch
          %435 = sbr.rel (%p433) target = $region44
        $region43: #{tpu_custom_call.1} parent=11 // pred_region
          _
        $region44: #{tpu_custom_call.1} parent=11 // pred_fallthru
          _
        // Predicated region
        $region45: #{tpu_custom_call.1} parent=11 // pred_check
          %p436 = pneg %p253
        $region46: #{tpu_custom_call.1} parent=11 // pred_check_branch
          %438 = sbr.rel (%p436) target = $region48
        $region47: #{tpu_custom_call.1} parent=11 // pred_region
          %440 = vsyncadd [#allocation6], 0
          %s441 = sshll.u32 %s9, 4
          %s442 = int_to_ptr.hbm [resolvable:$true] %s441
          %s443 = sshll.u32 [#allocation5], 4
          %s444 = int_to_ptr.vmem [resolvable:$true] %s443
          %449 = dma.hbm_to_vmem [thread:$0]  %s442, 256, %s444, [#allocation6], 64, 64, 4
        $region48: #{tpu_custom_call.1} parent=11 // pred_fallthru
          _
        // Predicated region
        $region49: #{tpu_custom_call.1} parent=11 // pred_check
          %p450 = pneg %p274
        $region50: #{tpu_custom_call.1} parent=11 // pred_check_branch
          %452 = sbr.rel (%p450) target = $region52
        $region51: #{tpu_custom_call.1} parent=11 // pred_region
          _
        $region52: #{tpu_custom_call.1} parent=11 // pred_fallthru
          _
        // Predicated region
        $region53: #{tpu_custom_call.1} parent=11 // pred_check
          %p453 = pneg %p295
        $region54: #{tpu_custom_call.1} parent=11 // pred_check_branch
          %455 = sbr.rel (%p453) target = $region56
        $region55: #{tpu_custom_call.1} parent=11 // pred_region
          _
        $region56: #{tpu_custom_call.1} parent=11 // pred_fallthru
          _
        // Predicated region
        $region57: #{tpu_custom_call.1} parent=11 // pred_check
          %p456 = pneg %p316
        $region58: #{tpu_custom_call.1} parent=11 // pred_check_branch
          %458 = sbr.rel (%p456) target = $region60
        $region59: #{tpu_custom_call.1} parent=11 // pred_region
          _
        $region60: #{tpu_custom_call.1} parent=11 // pred_fallthru
          _
        // Predicated region
        $region61: #{tpu_custom_call.1} parent=11 // pred_check
          %p459 = pneg %p337
        $region62: #{tpu_custom_call.1} parent=11 // pred_check_branch
          %461 = sbr.rel (%p459) target = $region64
        $region63: #{tpu_custom_call.1} parent=11 // pred_region
          _
        $region64: #{tpu_custom_call.1} parent=11 // pred_fallthru
          _
        // Predicated region
        $region65: #{tpu_custom_call.1} parent=11 // pred_check
          %p462 = pneg %p358
        $region66: #{tpu_custom_call.1} parent=11 // pred_check_branch
          %464 = sbr.rel (%p462) target = $region68
        $region67: #{tpu_custom_call.1} parent=11 // pred_region
          _
        $region68: #{tpu_custom_call.1} parent=11 // pred_fallthru
          _
      $region12: #{tpu_custom_call.1} parent=5 // pred_fallthru
        _
      %p465 = scmp.lt.s32.totalorder %s26, 2
      // Predicated region
      $region69: #{tpu_custom_call.1} parent=5 // pred_check
        %p466 = pneg %p465
      $region70: #{tpu_custom_call.1} parent=5 // pred_check_branch
        %468 = sbr.rel (%p466) target = $region72
      $region71: #{tpu_custom_call.1} parent=5 // pred_region
        // Predicated region
        $region73: #{tpu_custom_call.1} parent=71 // pred_check
          %p469 = pneg %p58
        $region74: #{tpu_custom_call.1} parent=71 // pred_check_branch
          %471 = sbr.rel (%p469) target = $region76
        $region75: #{tpu_custom_call.1} parent=71 // pred_region
          %p472 = scmp.lt.s32.totalorder %s33, 1
          %s473 = scalar_select %p472, %s33, 1
          %s474 = smul.addr %s473, 8
          %s475 = scalar_lea.vmem %s0, %s474
        $region76: #{tpu_custom_call.1} parent=71 // pred_fallthru
          _
      $region72: #{tpu_custom_call.1} parent=5 // pred_fallthru
        _
      %p476 = scmp.le.s32.totalorder 1, %s26
      %p477 = scmp.lt.s32.totalorder %s26, 3
      %p478 = pnand %p476, %p477
      %p479 = pneg %p478
      // Predicated region
      $region77: #{tpu_custom_call.1} parent=5 // pred_check
        _
      $region78: #{tpu_custom_call.1} parent=5 // pred_check_branch
        %481 = sbr.rel (%p478) target = $region80
      $region79: #{tpu_custom_call.1} parent=5 // pred_region
        %s482 = ssub.s32 %s26, 1
        // Predicated region
        $region81: #{tpu_custom_call.1} parent=79 // pred_check
          %p483 = pneg %p169
        $region82: #{tpu_custom_call.1} parent=79 // pred_check_branch
          %485 = sbr.rel (%p483) target = $region84
        $region83: #{tpu_custom_call.1} parent=79 // pred_region
          %487 = dma.done [#allocation3], 256
        $region84: #{tpu_custom_call.1} parent=79 // pred_fallthru
          _
        // Predicated region
        $region85: #{tpu_custom_call.1} parent=79 // pred_check
          %p488 = pneg %p253
        $region86: #{tpu_custom_call.1} parent=79 // pred_check_branch
          %490 = sbr.rel (%p488) target = $region88
        $region87: #{tpu_custom_call.1} parent=79 // pred_region
          %492 = dma.done [#allocation6], 256
        $region88: #{tpu_custom_call.1} parent=79 // pred_fallthru
          _
        %p493 = scmp.lt.s32.totalorder %s35, 1
        %s494 = scalar_select %p493, %s35, 1
        %s495 = smul.addr %s494, 8
        %s496 = scalar_lea.vmem %s0, %s495
        %p497 = pneg %p64
        %p498 = pneg %p61
        %p499 = pneg %p85
        %p500 = pneg %p82
        %p501 = pneg %p106
        %p502 = pneg %p103
        %p503 = pneg %p127
        %p504 = pneg %p124
        %p505 = pneg %p148
        %p506 = pneg %p145
        %p507 = pneg %p169
        %p508 = pneg %p166
        %p509 = pneg %p190
        %p510 = pneg %p187
        %p511 = pneg %p211
        %p512 = pneg %p208
        %p513 = pneg %p232
        %p514 = pneg %p229
        %p515 = pneg %p253
        %p516 = pneg %p250
        %p517 = pneg %p274
        %p518 = pneg %p271
        %p519 = pneg %p295
        %p520 = pneg %p292
        %p521 = pneg %p316
        %p522 = pneg %p313
        %p523 = pneg %p337
        %p524 = pneg %p334
        %p525 = pneg %p358
        %p526 = pneg %p355
        %p527 = pneg %p386
        %p528 = pneg %p383
        %s529 = sand.u32 %s373, 1
        %s530 = scalar_lea.sflag [#allocation4], %s529
        %s531 = sand.u32 %s373, 1
        %s532 = smul.addr %s531, 8
        %s533 = scalar_lea.vmem [#allocation7], %s532
        %p534 = scmp.lt.s32.totalorder %s35, 1
        %s535 = scalar_select %p534, %s35, 1
        %s536 = smul.addr %s535, 8
        %s537 = scalar_lea.vmem %s0, %s536
        %s539 = smul.u32 %s36, 8
        %v540 = vld [vmem:[%s537] sm:$0xff]
        %s541 = scalar_lea.vmem %s537, %s539
        %v542 = vld [vmem:[%s541] sm:$0xff]
        %v543 = vpack.c.bf16 %v540, %v540
        %v544 = vpack.c.bf16 %v542, %v542
        %v545 = vld [vmem:[%s1] sm:$0xf]
        %v546 = vld [vmem:[%s1 + $0x4] sm:$0xf]
        %v547 = vld [vmem:[%s1 + $0x8] sm:$0xf]
        %v548 = vld [vmem:[%s1 + $0xc] sm:$0xf]
        %v549 = vld [vmem:[%s2] sm:$0x1]
        %v551 = vperm.slane %v549, 0
        %v557 = vunpack.c.l.b16 %v545
        %v558 = vunpack.c.l.b16 %v546
        %v559 = vunpack.c.l.b16 %v547
        %v560 = vunpack.c.l.b16 %v548
        %v561 = vpack.c.b16 %v558, %v557
        %v562 = vpack.c.b16 %v560, %v559
        %vm565 = vcmask 261120
        %v567 = vsel %vm565, %v544, 0
        %569 = vmatpush.bf16.msra.mxu0 0
        %570 = vmatpush.bf16.msra.mxu0 0
        %571 = vmatpush.bf16.msra.mxu0 0
        %572 = vmatpush.bf16.msra.mxu0 0
        %573 = vmatpush.bf16.msra.mxu0 0
        %574 = vmatpush.bf16.msra.mxu0 0
        %575 = vmatpush.bf16.msra.mxu0 %v562
        %576 = vmatpush.bf16.msra.mxu0 %v561
        %577 = vmatmul.bf16.gmra.mxu0 %v567
        %v578 = vpop.f32.mrf.mxu0
        %v579 = vadd.f32 %v551, %v578
        %v580 = vpop.f32.mrf.mxu0
        %581 = vdwg.mxu0
        %v582 = vld [vmem:[%s3] sm:$0xf]
        %v583 = vld [vmem:[%s3 + $0x4] sm:$0xf]
        %v584 = vld [vmem:[%s3 + $0x8] sm:$0xf]
        %v585 = vld [vmem:[%s3 + $0xc] sm:$0xf]
        %v586 = vld [vmem:[%s4] sm:$0x1]
        %v588 = vperm.slane %v586, 0
        %v594 = vunpack.c.l.b16 %v582
        %v595 = vunpack.c.l.b16 %v583
        %v596 = vunpack.c.l.b16 %v584
        %v597 = vunpack.c.l.b16 %v585
        %v598 = vpack.c.b16 %v595, %v594
        %v599 = vpack.c.b16 %v597, %v596
        %v603 = vsel %vm565, %v543, 0
        %605 = vmatpush.bf16.msra.mxu0 0
        %606 = vmatpush.bf16.msra.mxu0 0
        %607 = vmatpush.bf16.msra.mxu0 0
        %608 = vmatpush.bf16.msra.mxu0 0
        %609 = vmatpush.bf16.msra.mxu0 0
        %610 = vmatpush.bf16.msra.mxu0 0
        %611 = vmatpush.bf16.msra.mxu0 %v599
        %612 = vmatpush.bf16.msra.mxu0 %v598
        %613 = vmatmul.bf16.gmra.mxu0 %v603
        %v614 = vpop.f32.mrf.mxu0
        %v615 = vadd.f32 %v588, %v614
        %v616 = vpop.f32.mrf.mxu0
        %617 = vdwg.mxu0
        %619 = vrot.lane.b32.xlu0 %v579, 120
        %v620 = vpop.permute.xlu0 %619
        %622 = vrot.lane.b32.xlu0 %v579, 112
        %v623 = vpop.permute.xlu0 %622
        %625 = vrot.lane.b32.xlu0 %v579, 104
        %v626 = vpop.permute.xlu0 %625
        %v628 = vrot.slane %v623, 4
        %vm629 = vcmask 1047556
        %v630 = vsel %vm629, %v628, %v579
        %v631 = vrot.slane %v579, 4
        %v632 = vsel %vm629, %v623, %v631
        %v634 = vunpack.c.l.s4 1983009808
        %v635 = vunpack.c.0.s8 %v634
        %v636 = vperm.slane %v630, %v635
        %v638 = vunpack.c.l.s4 1983009808
        %v639 = vunpack.c.0.s8 %v638
        %v640 = vperm.slane %v632, %v639
        %v641 = vrot.slane %v626, 4
        %v642 = vsel %vm629, %v641, %v620
        %v643 = vrot.slane %v620, 4
        %v644 = vsel %vm629, %v626, %v643
        %v646 = vunpack.c.l.s4 1983009808
        %v647 = vunpack.c.0.s8 %v646
        %v648 = vperm.slane %v642, %v647
        %v650 = vunpack.c.l.s4 1983009808
        %v651 = vunpack.c.0.s8 %v650
        %v652 = vperm.slane %v644, %v651
        %v653 = vrot.slane %v648, 4
        %v654 = vsel %vm629, %v653, %v636
        %v655 = vrot.slane %v636, 4
        %v656 = vsel %vm629, %v648, %v655
        %v658 = vunpack.c.l.s4 1934713408
        %v659 = vunpack.c.0.s8 %v658
        %v660 = vperm.slane %v654, %v659
        %v662 = vunpack.c.l.s4 1934713408
        %v663 = vunpack.c.0.s8 %v662
        %v664 = vperm.slane %v656, %v663
        %v665 = vrot.slane %v652, 4
        %v666 = vsel %vm629, %v665, %v640
        %v667 = vrot.slane %v640, 4
        %v668 = vsel %vm629, %v652, %v667
        %v670 = vunpack.c.l.s4 1934713408
        %v671 = vunpack.c.0.s8 %v670
        %v672 = vperm.slane %v666, %v671
        %v674 = vunpack.c.l.s4 1934713408
        %v675 = vunpack.c.0.s8 %v674
        %v676 = vperm.slane %v668, %v675
        %v677 = vrot.slane %v660, 4
        %v678 = vsel %vm629, 0.0, %v677
        %v679 = vrot.slane %v664, 4
        %v680 = vsel %vm629, 0.0, %v679
        %v681 = vrot.slane %v672, 4
        %v682 = vsel %vm629, 0.0, %v681
        %v683 = vrot.slane %v676, 4
        %v684 = vsel %vm629, 0.0, %v683
        %v685 = vsel %vm629, %v679, %v660
        %v687 = vunpack.c.l.s4 1983009808
        %v688 = vunpack.c.0.s8 %v687
        %v689 = vperm.slane %v685, %v688
        %v690 = vrot.slane %v680, 4
        %v691 = vsel %vm629, %v690, %v678
        %v693 = vunpack.c.l.s4 1983009808
        %v694 = vunpack.c.0.s8 %v693
        %v695 = vperm.slane %v691, %v694
        %v696 = vsel %vm629, %v683, %v672
        %v698 = vunpack.c.l.s4 1983009808
        %v699 = vunpack.c.0.s8 %v698
        %v700 = vperm.slane %v696, %v699
        %v701 = vrot.slane %v684, 4
        %v702 = vsel %vm629, %v701, %v682
        %v704 = vunpack.c.l.s4 1983009808
        %v705 = vunpack.c.0.s8 %v704
        %v706 = vperm.slane %v702, %v705
        %v707 = vrot.slane %v695, 4
        %v708 = vsel %vm629, %v707, %v689
        %v709 = vrot.slane %v689, 4
        %v710 = vsel %vm629, %v695, %v709
        %v712 = vunpack.c.l.s4 1934713408
        %v713 = vunpack.c.0.s8 %v712
        %v714 = vperm.slane %v708, %v713
        %v716 = vunpack.c.l.s4 1934713408
        %v717 = vunpack.c.0.s8 %v716
        %v718 = vperm.slane %v710, %v717
        %v719 = vrot.slane %v706, 4
        %v720 = vsel %vm629, %v719, %v700
        %v721 = vrot.slane %v700, 4
        %v722 = vsel %vm629, %v706, %v721
        %v724 = vunpack.c.l.s4 1934713408
        %v725 = vunpack.c.0.s8 %v724
        %v726 = vperm.slane %v720, %v725
        %v728 = vunpack.c.l.s4 1934713408
        %v729 = vunpack.c.0.s8 %v728
        %v730 = vperm.slane %v722, %v729
        %v731 = vrot.slane %v726, 4
        %v732 = vsel %vm629, %v731, %v714
        %v733 = vrot.slane %v714, 4
        %v734 = vsel %vm629, %v726, %v733
        %v735 = vrot.slane %v730, 4
        %v736 = vsel %vm629, %v735, %v718
        %v737 = vrot.slane %v718, 4
        %v738 = vsel %vm629, %v730, %v737
        %740 = vrot.lane.b32.xlu0 %v615, 120
        %v741 = vpop.permute.xlu0 %740
        %743 = vrot.lane.b32.xlu0 %v615, 112
        %v744 = vpop.permute.xlu0 %743
        %746 = vrot.lane.b32.xlu0 %v615, 104
        %v747 = vpop.permute.xlu0 %746
        %v749 = vrot.slane %v744, 4
        %v750 = vsel %vm629, %v749, %v615
        %v751 = vrot.slane %v615, 4
        %v752 = vsel %vm629, %v744, %v751
        %v754 = vunpack.c.l.s4 1983009808
        %v755 = vunpack.c.0.s8 %v754
        %v756 = vperm.slane %v750, %v755
        %v758 = vunpack.c.l.s4 1983009808
        %v759 = vunpack.c.0.s8 %v758
        %v760 = vperm.slane %v752, %v759
        %v761 = vrot.slane %v747, 4
        %v762 = vsel %vm629, %v761, %v741
        %v763 = vrot.slane %v741, 4
        %v764 = vsel %vm629, %v747, %v763
        %v766 = vunpack.c.l.s4 1983009808
        %v767 = vunpack.c.0.s8 %v766
        %v768 = vperm.slane %v762, %v767
        %v770 = vunpack.c.l.s4 1983009808
        %v771 = vunpack.c.0.s8 %v770
        %v772 = vperm.slane %v764, %v771
        %v773 = vrot.slane %v768, 4
        %v774 = vsel %vm629, %v773, %v756
        %v775 = vrot.slane %v756, 4
        %v776 = vsel %vm629, %v768, %v775
        %v778 = vunpack.c.l.s4 1934713408
        %v779 = vunpack.c.0.s8 %v778
        %v780 = vperm.slane %v774, %v779
        %v782 = vunpack.c.l.s4 1934713408
        %v783 = vunpack.c.0.s8 %v782
        %v784 = vperm.slane %v776, %v783
        %v785 = vrot.slane %v772, 4
        %v786 = vsel %vm629, %v785, %v760
        %v787 = vrot.slane %v760, 4
        %v788 = vsel %vm629, %v772, %v787
        %v790 = vunpack.c.l.s4 1934713408
        %v791 = vunpack.c.0.s8 %v790
        %v792 = vperm.slane %v786, %v791
        %v794 = vunpack.c.l.s4 1934713408
        %v795 = vunpack.c.0.s8 %v794
        %v796 = vperm.slane %v788, %v795
        %v797 = vrot.slane %v780, 4
        %v798 = vsel %vm629, 0.0, %v797
        %v799 = vrot.slane %v784, 4
        %v800 = vsel %vm629, 0.0, %v799
        %v801 = vrot.slane %v792, 4
        %v802 = vsel %vm629, 0.0, %v801
        %v803 = vrot.slane %v796, 4
        %v804 = vsel %vm629, 0.0, %v803
        %v805 = vsel %vm629, %v799, %v780
        %v807 = vunpack.c.l.s4 1983009808
        %v808 = vunpack.c.0.s8 %v807
        %v809 = vperm.slane %v805, %v808
        %v810 = vrot.slane %v800, 4
        %v811 = vsel %vm629, %v810, %v798
        %v813 = vunpack.c.l.s4 1983009808
        %v814 = vunpack.c.0.s8 %v813
        %v815 = vperm.slane %v811, %v814
        %v816 = vsel %vm629, %v803, %v792
        %v818 = vunpack.c.l.s4 1983009808
        %v819 = vunpack.c.0.s8 %v818
        %v820 = vperm.slane %v816, %v819
        %v821 = vrot.slane %v804, 4
        %v822 = vsel %vm629, %v821, %v802
        %v824 = vunpack.c.l.s4 1983009808
        %v825 = vunpack.c.0.s8 %v824
        %v826 = vperm.slane %v822, %v825
        %v827 = vrot.slane %v815, 4
        %v828 = vsel %vm629, %v827, %v809
        %v829 = vrot.slane %v809, 4
        %v830 = vsel %vm629, %v815, %v829
        %v832 = vunpack.c.l.s4 1934713408
        %v833 = vunpack.c.0.s8 %v832
        %v834 = vperm.slane %v828, %v833
        %v836 = vunpack.c.l.s4 1934713408
        %v837 = vunpack.c.0.s8 %v836
        %v838 = vperm.slane %v830, %v837
        %v839 = vrot.slane %v826, 4
        %v840 = vsel %vm629, %v839, %v820
        %v841 = vrot.slane %v820, 4
        %v842 = vsel %vm629, %v826, %v841
        %v844 = vunpack.c.l.s4 1934713408
        %v845 = vunpack.c.0.s8 %v844
        %v846 = vperm.slane %v840, %v845
        %v848 = vunpack.c.l.s4 1934713408
        %v849 = vunpack.c.0.s8 %v848
        %v850 = vperm.slane %v842, %v849
        %v851 = vrot.slane %v846, 4
        %v852 = vsel %vm629, %v851, %v834
        %v853 = vrot.slane %v834, 4
        %v854 = vsel %vm629, %v846, %v853
        %v855 = vrot.slane %v850, 4
        %v856 = vsel %vm629, %v855, %v838
        %v857 = vrot.slane %v838, 4
        %v858 = vsel %vm629, %v850, %v857
        %859 = vrot.lane.b32.xlu0 %v615, 96
        %v860 = vpop.permute.xlu0 %859
        %861 = vrot.lane.b32.xlu0 %v741, 96
        %v862 = vpop.permute.xlu0 %861
        %863 = vrot.lane.b32.xlu0 %v744, 96
        %v864 = vpop.permute.xlu0 %863
        %865 = vrot.lane.b32.xlu0 %v747, 96
        %v866 = vpop.permute.xlu0 %865
        %v871 = vrot.slane %v864, 4
        %v872 = vsel %vm629, %v871, %v860
        %v873 = vrot.slane %v860, 4
        %v874 = vsel %vm629, %v864, %v873
        %v876 = vunpack.c.l.s4 1983009808
        %v877 = vunpack.c.0.s8 %v876
        %v878 = vperm.slane %v872, %v877
        %v880 = vunpack.c.l.s4 1983009808
        %v881 = vunpack.c.0.s8 %v880
        %v882 = vperm.slane %v874, %v881
        %v883 = vrot.slane %v866, 4
        %v884 = vsel %vm629, %v883, %v862
        %v885 = vrot.slane %v862, 4
        %v886 = vsel %vm629, %v866, %v885
        %v888 = vunpack.c.l.s4 1983009808
        %v889 = vunpack.c.0.s8 %v888
        %v890 = vperm.slane %v884, %v889
        %v892 = vunpack.c.l.s4 1983009808
        %v893 = vunpack.c.0.s8 %v892
        %v894 = vperm.slane %v886, %v893
        %v895 = vrot.slane %v890, 4
        %v896 = vsel %vm629, %v895, %v878
        %v897 = vrot.slane %v878, 4
        %v898 = vsel %vm629, %v890, %v897
        %v900 = vunpack.c.l.s4 1934713408
        %v901 = vunpack.c.0.s8 %v900
        %v902 = vperm.slane %v896, %v901
        %v904 = vunpack.c.l.s4 1934713408
        %v905 = vunpack.c.0.s8 %v904
        %v906 = vperm.slane %v898, %v905
        %v907 = vrot.slane %v894, 4
        %v908 = vsel %vm629, %v907, %v882
        %v909 = vrot.slane %v882, 4
        %v910 = vsel %vm629, %v894, %v909
        %v912 = vunpack.c.l.s4 1934713408
        %v913 = vunpack.c.0.s8 %v912
        %v914 = vperm.slane %v908, %v913
        %v916 = vunpack.c.l.s4 1934713408
        %v917 = vunpack.c.0.s8 %v916
        %v918 = vperm.slane %v910, %v917
        %v919 = vrot.slane %v902, 4
        %v920 = vsel %vm629, 0.0, %v919
        %v921 = vrot.slane %v906, 4
        %v922 = vsel %vm629, 0.0, %v921
        %v923 = vrot.slane %v914, 4
        %v924 = vsel %vm629, 0.0, %v923
        %v925 = vrot.slane %v918, 4
        %v926 = vsel %vm629, 0.0, %v925
        %v927 = vsel %vm629, %v921, %v902
        %v929 = vunpack.c.l.s4 1983009808
        %v930 = vunpack.c.0.s8 %v929
        %v931 = vperm.slane %v927, %v930
        %v932 = vrot.slane %v922, 4
        %v933 = vsel %vm629, %v932, %v920
        %v935 = vunpack.c.l.s4 1983009808
        %v936 = vunpack.c.0.s8 %v935
        %v937 = vperm.slane %v933, %v936
        %v938 = vsel %vm629, %v925, %v914
        %v940 = vunpack.c.l.s4 1983009808
        %v941 = vunpack.c.0.s8 %v940
        %v942 = vperm.slane %v938, %v941
        %v943 = vrot.slane %v926, 4
        %v944 = vsel %vm629, %v943, %v924
        %v946 = vunpack.c.l.s4 1983009808
        %v947 = vunpack.c.0.s8 %v946
        %v948 = vperm.slane %v944, %v947
        %v949 = vrot.slane %v937, 4
        %v950 = vsel %vm629, %v949, %v931
        %v951 = vrot.slane %v931, 4
        %v952 = vsel %vm629, %v937, %v951
        %v954 = vunpack.c.l.s4 1934713408
        %v955 = vunpack.c.0.s8 %v954
        %v956 = vperm.slane %v950, %v955
        %v958 = vunpack.c.l.s4 1934713408
        %v959 = vunpack.c.0.s8 %v958
        %v960 = vperm.slane %v952, %v959
        %v961 = vrot.slane %v948, 4
        %v962 = vsel %vm629, %v961, %v942
        %v963 = vrot.slane %v942, 4
        %v964 = vsel %vm629, %v948, %v963
        %v966 = vunpack.c.l.s4 1934713408
        %v967 = vunpack.c.0.s8 %v966
        %v968 = vperm.slane %v962, %v967
        %v970 = vunpack.c.l.s4 1934713408
        %v971 = vunpack.c.0.s8 %v970
        %v972 = vperm.slane %v964, %v971
        %v973 = vrot.slane %v968, 4
        %v974 = vsel %vm629, %v973, %v956
        %v975 = vrot.slane %v956, 4
        %v976 = vsel %vm629, %v968, %v975
        %v977 = vrot.slane %v972, 4
        %v978 = vsel %vm629, %v977, %v960
        %v979 = vrot.slane %v960, 4
        %v980 = vsel %vm629, %v972, %v979
        %v981 = vpack.c.bf16 %v732, %v732
        %v982 = vpack.c.bf16 %v734, %v734
        %v983 = vpack.c.bf16 %v736, %v736
        %v984 = vpack.c.bf16 %v738, %v738
        %v985 = vpack.c.bf16 %v852, %v852
        %v986 = vpack.c.bf16 %v854, %v854
        %v987 = vpack.c.bf16 %v856, %v856
        %v988 = vpack.c.bf16 %v858, %v858
        %vm989 = vcmask 64512
        %v991 = vsel %vm989, %v981, 0
        %v994 = vsel %vm989, %v985, 0
        %996 = vmatpush.bf16.xpose.msra.mxu0 0
        %997 = vmatpush.bf16.xpose.msra.mxu0 0
        %998 = vmatpush.bf16.xpose.msra.mxu0 0
        %999 = vmatpush.bf16.xpose.msra.mxu0 0
        %1000 = vmatpush.bf16.xpose.msra.mxu0 0
        %1001 = vmatpush.bf16.xpose.msra.mxu0 0
        %1002 = vmatpush.bf16.xpose.msra.mxu0 0
        %1003 = vmatpush.bf16.xpose.msra.mxu0 %v994
        %1004 = vmatmul.bf16.gmra.mxu0 %v991
        %v1005 = vpop.f32.mrf.mxu0
        %v1006 = vadd.f32 0.0, %v1005
        %v1007 = vpop.f32.mrf.mxu0
        %1008 = vdwg.mxu0
        %v1010 = vsel %vm989, %v982, 0
        %v1013 = vsel %vm989, %v986, 0
        %1015 = vmatpush.bf16.xpose.msra.mxu0 0
        %1016 = vmatpush.bf16.xpose.msra.mxu0 0
        %1017 = vmatpush.bf16.xpose.msra.mxu0 0
        %1018 = vmatpush.bf16.xpose.msra.mxu0 0
        %1019 = vmatpush.bf16.xpose.msra.mxu0 0
        %1020 = vmatpush.bf16.xpose.msra.mxu0 0
        %1021 = vmatpush.bf16.xpose.msra.mxu0 0
        %1022 = vmatpush.bf16.xpose.msra.mxu0 %v1013
        %1023 = vmatmul.bf16.gmra.mxu0 %v1010
        %v1024 = vpop.f32.mrf.mxu0
        %v1025 = vadd.f32 0.0, %v1024
        %v1026 = vpop.f32.mrf.mxu0
        %1027 = vdwg.mxu0
        %v1029 = vsel %vm989, %v983, 0
        %v1032 = vsel %vm989, %v987, 0
        %1034 = vmatpush.bf16.xpose.msra.mxu0 0
        %1035 = vmatpush.bf16.xpose.msra.mxu0 0
        %1036 = vmatpush.bf16.xpose.msra.mxu0 0
        %1037 = vmatpush.bf16.xpose.msra.mxu0 0
        %1038 = vmatpush.bf16.xpose.msra.mxu0 0
        %1039 = vmatpush.bf16.xpose.msra.mxu0 0
        %1040 = vmatpush.bf16.xpose.msra.mxu0 0
        %1041 = vmatpush.bf16.xpose.msra.mxu0 %v1032
        %1042 = vmatmul.bf16.gmra.mxu0 %v1029
        %v1043 = vpop.f32.mrf.mxu0
        %v1044 = vadd.f32 0.0, %v1043
        %v1045 = vpop.f32.mrf.mxu0
        %1046 = vdwg.mxu0
        %v1048 = vsel %vm989, %v984, 0
        %v1051 = vsel %vm989, %v988, 0
        %1053 = vmatpush.bf16.xpose.msra.mxu0 0
        %1054 = vmatpush.bf16.xpose.msra.mxu0 0
        %1055 = vmatpush.bf16.xpose.msra.mxu0 0
        %1056 = vmatpush.bf16.xpose.msra.mxu0 0
        %1057 = vmatpush.bf16.xpose.msra.mxu0 0
        %1058 = vmatpush.bf16.xpose.msra.mxu0 0
        %1059 = vmatpush.bf16.xpose.msra.mxu0 0
        %1060 = vmatpush.bf16.xpose.msra.mxu0 %v1051
        %1061 = vmatmul.bf16.gmra.mxu0 %v1048
        %v1062 = vpop.f32.mrf.mxu0
        %v1063 = vadd.f32 0.0, %v1062
        %v1064 = vpop.f32.mrf.mxu0
        %1065 = vdwg.mxu0
        %v1066 = vmul.f32 %v1006, 0.35355338
        %v1067 = vmul.f32 %v1025, 0.35355338
        %v1068 = vmul.f32 %v1044, 0.35355338
        %v1069 = vmul.f32 %v1063, 0.35355338
        %v1070 = vsel %vm989, %v1066, -inf
        %1071 = vmax.xlane.f32.xlu0 %v1070
        %v1072 = vpop.xlane.xlu0 %1071
        %v1073 = vsel %vm989, %v1067, -inf
        %1074 = vmax.xlane.f32.xlu0 %v1073
        %v1075 = vpop.xlane.xlu0 %1074
        %v1076 = vsel %vm989, %v1068, -inf
        %1077 = vmax.xlane.f32.xlu0 %v1076
        %v1078 = vpop.xlane.xlu0 %1077
        %v1079 = vsel %vm989, %v1069, -inf
        %1080 = vmax.xlane.f32.xlu0 %v1079
        %v1081 = vpop.xlane.xlu0 %1080
        %v1082 = vsub.f32 %v1066, %v1072
        %v1083 = vsub.f32 %v1067, %v1075
        %v1084 = vsub.f32 %v1068, %v1078
        %v1085 = vsub.f32 %v1069, %v1081
        %v1086 = vmul.f32 %v1082, 1.442695
        %v1087 = vpow.pop %v1086
        %v1088 = vmul.f32 %v1083, 1.442695
        %v1089 = vpow.pop %v1088
        %v1090 = vmul.f32 %v1084, 1.442695
        %v1091 = vpow.pop %v1090
        %v1092 = vmul.f32 %v1085, 1.442695
        %v1093 = vpow.pop %v1092
        %v1094 = vsel %vm989, %v1087, 0.0
        %1095 = vadd.xlane.f32.xlu0 %v1094
        %v1096 = vpop.xlane.xlu0 %1095
        %v1097 = vsel %vm989, %v1089, 0.0
        %1098 = vadd.xlane.f32.xlu0 %v1097
        %v1099 = vpop.xlane.xlu0 %1098
        %v1100 = vsel %vm989, %v1091, 0.0
        %1101 = vadd.xlane.f32.xlu0 %v1100
        %v1102 = vpop.xlane.xlu0 %1101
        %v1103 = vsel %vm989, %v1093, 0.0
        %1104 = vadd.xlane.f32.xlu0 %v1103
        %v1105 = vpop.xlane.xlu0 %1104
        %v1106 = vrcp.pop %v1096
        %v1107 = vrcp.pop %v1099
        %v1108 = vrcp.pop %v1102
        %v1109 = vrcp.pop %v1105
        %v1110 = vmul.f32 %v1087, %v1106
        %v1111 = vmul.f32 %v1089, %v1107
        %v1112 = vmul.f32 %v1091, %v1108
        %v1113 = vmul.f32 %v1093, %v1109
        %v1114 = vpack.c.bf16 %v1110, %v1110
        %v1115 = vpack.c.bf16 %v1111, %v1111
        %v1116 = vpack.c.bf16 %v1112, %v1112
        %v1117 = vpack.c.bf16 %v1113, %v1113
        %v1118 = vpack.c.bf16 %v974, %v974
        %v1119 = vpack.c.bf16 %v976, %v976
        %v1120 = vpack.c.bf16 %v978, %v978
        %v1121 = vpack.c.bf16 %v980, %v980
        %v1123 = vsel %vm989, %v1114, 0
        %vm1125 = vcmask 1043456
        %v1127 = vsel %vm1125, %v1118, 0
        %1129 = vmatpush.bf16.msra.mxu0 0
        %1130 = vmatpush.bf16.msra.mxu0 0
        %1131 = vmatpush.bf16.msra.mxu0 0
        %1132 = vmatpush.bf16.msra.mxu0 0
        %1133 = vmatpush.bf16.msra.mxu0 0
        %1134 = vmatpush.bf16.msra.mxu0 0
        %1135 = vmatpush.bf16.msra.mxu0 0
        %1136 = vmatpush.bf16.msra.mxu0 %v1127
        %1137 = vmatmul.bf16.gmra.mxu0 %v1123
        %v1138 = vpop.f32.mrf.mxu0
        %v1139 = vadd.f32 0.0, %v1138
        %v1140 = vpop.f32.mrf.mxu0
        %1141 = vdwg.mxu0
        %v1143 = vsel %vm989, %v1115, 0
        %v1146 = vsel %vm1125, %v1119, 0
        %1148 = vmatpush.bf16.msra.mxu0 0
        %1149 = vmatpush.bf16.msra.mxu0 0
        %1150 = vmatpush.bf16.msra.mxu0 0
        %1151 = vmatpush.bf16.msra.mxu0 0
        %1152 = vmatpush.bf16.msra.mxu0 0
        %1153 = vmatpush.bf16.msra.mxu0 0
        %1154 = vmatpush.bf16.msra.mxu0 0
        %1155 = vmatpush.bf16.msra.mxu0 %v1146
        %1156 = vmatmul.bf16.gmra.mxu0 %v1143
        %v1157 = vpop.f32.mrf.mxu0
        %v1158 = vadd.f32 0.0, %v1157
        %v1159 = vpop.f32.mrf.mxu0
        %1160 = vdwg.mxu0
        %v1162 = vsel %vm989, %v1116, 0
        %v1165 = vsel %vm1125, %v1120, 0
        %1167 = vmatpush.bf16.msra.mxu0 0
        %1168 = vmatpush.bf16.msra.mxu0 0
        %1169 = vmatpush.bf16.msra.mxu0 0
        %1170 = vmatpush.bf16.msra.mxu0 0
        %1171 = vmatpush.bf16.msra.mxu0 0
        %1172 = vmatpush.bf16.msra.mxu0 0
        %1173 = vmatpush.bf16.msra.mxu0 0
        %1174 = vmatpush.bf16.msra.mxu0 %v1165
        %1175 = vmatmul.bf16.gmra.mxu0 %v1162
        %v1176 = vpop.f32.mrf.mxu0
        %v1177 = vadd.f32 0.0, %v1176
        %v1178 = vpop.f32.mrf.mxu0
        %1179 = vdwg.mxu0
        %v1181 = vsel %vm989, %v1117, 0
        %v1184 = vsel %vm1125, %v1121, 0
        %1186 = vmatpush.bf16.msra.mxu0 0
        %1187 = vmatpush.bf16.msra.mxu0 0
        %1188 = vmatpush.bf16.msra.mxu0 0
        %1189 = vmatpush.bf16.msra.mxu0 0
        %1190 = vmatpush.bf16.msra.mxu0 0
        %1191 = vmatpush.bf16.msra.mxu0 0
        %1192 = vmatpush.bf16.msra.mxu0 0
        %1193 = vmatpush.bf16.msra.mxu0 %v1184
        %1194 = vmatmul.bf16.gmra.mxu0 %v1181
        %v1195 = vpop.f32.mrf.mxu0
        %v1196 = vadd.f32 0.0, %v1195
        %v1197 = vpop.f32.mrf.mxu0
        %1198 = vdwg.mxu0
        %v1199 = vrot.slane %v1177, 4
        %v1200 = vsel %vm629, %v1199, %v1139
        %v1201 = vrot.slane %v1139, 4
        %v1202 = vsel %vm629, %v1177, %v1201
        %v1204 = vunpack.c.l.s4 1983009808
        %v1205 = vunpack.c.0.s8 %v1204
        %v1206 = vperm.slane %v1200, %v1205
        %v1208 = vunpack.c.l.s4 1983009808
        %v1209 = vunpack.c.0.s8 %v1208
        %v1210 = vperm.slane %v1202, %v1209
        %v1211 = vrot.slane %v1196, 4
        %v1212 = vsel %vm629, %v1211, %v1158
        %v1213 = vrot.slane %v1158, 4
        %v1214 = vsel %vm629, %v1196, %v1213
        %v1216 = vunpack.c.l.s4 1983009808
        %v1217 = vunpack.c.0.s8 %v1216
        %v1218 = vperm.slane %v1212, %v1217
        %v1220 = vunpack.c.l.s4 1983009808
        %v1221 = vunpack.c.0.s8 %v1220
        %v1222 = vperm.slane %v1214, %v1221
        %v1223 = vrot.slane %v1218, 4
        %v1224 = vsel %vm629, %v1223, %v1206
        %v1225 = vrot.slane %v1206, 4
        %v1226 = vsel %vm629, %v1218, %v1225
        %v1228 = vunpack.c.l.s4 1934713408
        %v1229 = vunpack.c.0.s8 %v1228
        %v1230 = vperm.slane %v1224, %v1229
        %v1232 = vunpack.c.l.s4 1934713408
        %v1233 = vunpack.c.0.s8 %v1232
        %v1234 = vperm.slane %v1226, %v1233
        %v1235 = vrot.slane %v1222, 4
        %v1236 = vsel %vm629, %v1235, %v1210
        %v1237 = vrot.slane %v1210, 4
        %v1238 = vsel %vm629, %v1222, %v1237
        %v1240 = vunpack.c.l.s4 1934713408
        %v1241 = vunpack.c.0.s8 %v1240
        %v1242 = vperm.slane %v1236, %v1241
        %v1244 = vunpack.c.l.s4 1934713408
        %v1245 = vunpack.c.0.s8 %v1244
        %v1246 = vperm.slane %v1238, %v1245
        %v1247 = vrot.slane %v1230, 4
        %v1248 = vsel %vm629, 0.0, %v1247
        %v1249 = vrot.slane %v1234, 4
        %v1250 = vsel %vm629, 0.0, %v1249
        %v1251 = vrot.slane %v1242, 4
        %v1252 = vsel %vm629, 0.0, %v1251
        %v1253 = vrot.slane %v1246, 4
        %v1254 = vsel %vm629, 0.0, %v1253
        %v1255 = vsel %vm629, %v1249, %v1230
        %v1257 = vunpack.c.l.s4 1983009808
        %v1258 = vunpack.c.0.s8 %v1257
        %v1259 = vperm.slane %v1255, %v1258
        %v1260 = vrot.slane %v1250, 4
        %v1261 = vsel %vm629, %v1260, %v1248
        %v1263 = vunpack.c.l.s4 1983009808
        %v1264 = vunpack.c.0.s8 %v1263
        %v1265 = vperm.slane %v1261, %v1264
        %v1266 = vsel %vm629, %v1253, %v1242
        %v1268 = vunpack.c.l.s4 1983009808
        %v1269 = vunpack.c.0.s8 %v1268
        %v1270 = vperm.slane %v1266, %v1269
        %v1271 = vrot.slane %v1254, 4
        %v1272 = vsel %vm629, %v1271, %v1252
        %v1274 = vunpack.c.l.s4 1983009808
        %v1275 = vunpack.c.0.s8 %v1274
        %v1276 = vperm.slane %v1272, %v1275
        %v1277 = vrot.slane %v1265, 4
        %v1278 = vsel %vm629, %v1277, %v1259
        %v1279 = vrot.slane %v1259, 4
        %v1280 = vsel %vm629, %v1265, %v1279
        %v1282 = vunpack.c.l.s4 1934713408
        %v1283 = vunpack.c.0.s8 %v1282
        %v1284 = vperm.slane %v1278, %v1283
        %v1286 = vunpack.c.l.s4 1934713408
        %v1287 = vunpack.c.0.s8 %v1286
        %v1288 = vperm.slane %v1280, %v1287
        %v1289 = vrot.slane %v1276, 4
        %v1290 = vsel %vm629, %v1289, %v1270
        %v1291 = vrot.slane %v1270, 4
        %v1292 = vsel %vm629, %v1276, %v1291
        %v1294 = vunpack.c.l.s4 1934713408
        %v1295 = vunpack.c.0.s8 %v1294
        %v1296 = vperm.slane %v1290, %v1295
        %v1298 = vunpack.c.l.s4 1934713408
        %v1299 = vunpack.c.0.s8 %v1298
        %v1300 = vperm.slane %v1292, %v1299
        %v1301 = vrot.slane %v1296, 4
        %v1302 = vsel %vm629, %v1301, %v1284
        %v1303 = vrot.slane %v1284, 4
        %v1304 = vsel %vm629, %v1296, %v1303
        %v1305 = vrot.slane %v1300, 4
        %v1306 = vsel %vm629, %v1305, %v1288
        %v1307 = vrot.slane %v1288, 4
        %v1308 = vsel %vm629, %v1300, %v1307
        %1310 = vrot.lane.b32.xlu0 %v1304, 8
        %v1311 = vpop.permute.xlu0 %1310
        %1314 = vrot.lane.b32.xlu0 %v1306, 16
        %v1315 = vpop.permute.xlu0 %1314
        %1318 = vrot.lane.b32.xlu0 %v1308, 24
        %v1319 = vpop.permute.xlu0 %1318
        %v1321 = vsel %vm989, %v1302, %v1311
        %vm1322 = vcmask 130048
        %v1323 = vsel %vm1322, %v1321, %v1315
        %vm1324 = vcmask 195584
        %v1325 = vsel %vm1324, %v1323, %v1319
        %v1326 = vpack.c.bf16 %v1325, %v1325
        %v1327 = vld [vmem:[#allocation2] sm:$0xf]
        %v1328 = vld [vmem:[#allocation2 + $0x4] sm:$0xf]
        %v1329 = vld [vmem:[#allocation2 + $0x8] sm:$0xf]
        %v1330 = vld [vmem:[#allocation2 + $0xc] sm:$0xf]
        %v1331 = vld [vmem:[%s6] sm:$0x1]
        %v1333 = vperm.slane %v1331, 0
        %v1339 = vunpack.c.l.b16 %v1327
        %v1340 = vunpack.c.l.b16 %v1328
        %v1341 = vunpack.c.l.b16 %v1329
        %v1342 = vunpack.c.l.b16 %v1330
        %v1343 = vpack.c.b16 %v1340, %v1339
        %v1344 = vpack.c.b16 %v1342, %v1341
        %v1348 = vsel %vm565, %v1326, 0
        %1350 = vmatpush.bf16.msra.mxu0 0
        %1351 = vmatpush.bf16.msra.mxu0 0
        %1352 = vmatpush.bf16.msra.mxu0 0
        %1353 = vmatpush.bf16.msra.mxu0 0
        %1354 = vmatpush.bf16.msra.mxu0 0
        %1355 = vmatpush.bf16.msra.mxu0 0
        %1356 = vmatpush.bf16.msra.mxu0 %v1344
        %1357 = vmatpush.bf16.msra.mxu0 %v1343
        %1358 = vmatmul.bf16.gmra.mxu0 %v1348
        %v1359 = vpop.f32.mrf.mxu0
        %v1360 = vadd.f32 %v1333, %v1359
        %v1361 = vpop.f32.mrf.mxu0
        %1362 = vdwg.mxu0
        %v1363 = vadd.f32 %v542, %v1360
        %v1364 = vld [vmem:[%s7] sm:$0x1]
        %v1365 = vld [vmem:[%s8] sm:$0x1]
        %v1366 = vsel %vm565, %v1363, 0.0
        %1367 = vadd.xlane.f32.xlu0 %v1366
        %v1368 = vpop.xlane.xlu0 %1367
        %v1369 = vrcp.pop 32.0
        %v1370 = vmul.f32 32.0, %v1369
        %v1371 = vsub.f32 1.0, %v1370
        %v1372 = vmul.f32 %v1369, %v1371
        %v1373 = vadd.f32 %v1369, %v1372
        %vm1374 = vweird.f32 %v1369
        %v1375 = vsel %vm1374, %v1369, %v1373
        %v1376 = vmul.f32 %v1368, %v1375
        %v1377 = vsub.f32 %v1363, %v1376
        %v1378 = vmul.f32 %v1377, %v1377
        %v1379 = vsel %vm565, %v1378, 0.0
        %1380 = vadd.xlane.f32.xlu0 %v1379
        %v1381 = vpop.xlane.xlu0 %1380
        %v1382 = vmul.f32 %v1381, %v1375
        %v1383 = vadd.f32 %v1382, 1e-05
        %v1384 = vrsqrt.pop %v1383
        %v1385 = vmul.f32 %v1384, %v1383
        %v1386 = vmul.f32 %v1385, %v1384
        %v1387 = vmul.f32 0.5, %v1386
        %v1388 = vsub.f32 1.5, %v1387
        %v1389 = vmul.f32 %v1384, %v1388
        %vm1390 = vweird.f32 %v1383
        %vm1391 = vweird.f32 %v1384
        %vm1392 = vmor %vm1390, %vm1391
        %v1393 = vsel %vm1392, %v1384, %v1389
        %v1394 = vmul.f32 %v1377, %v1393
        %v1396 = vperm.slane %v1364, 0
        %v1398 = vmul.f32 %v1394, %v1396
        %v1400 = vperm.slane %v1365, 0
        %v1402 = vadd.f32 %v1398, %v1400
        %v1403 = vpack.c.bf16 %v1402, %v1402
        %v1404 = vld [vmem:[#allocation5] sm:$0xf]
        %v1405 = vld [vmem:[#allocation5 + $0x4] sm:$0xf]
        %v1406 = vld [vmem:[#allocation5 + $0x8] sm:$0xf]
        %v1407 = vld [vmem:[#allocation5 + $0xc] sm:$0xf]
        %v1408 = vld [vmem:[%s10] sm:$0x1]
        %v1410 = vperm.slane %v1408, 0
        %v1416 = vunpack.c.l.b16 %v1404
        %v1417 = vunpack.c.l.b16 %v1405
        %v1418 = vunpack.c.l.b16 %v1406
        %v1419 = vunpack.c.l.b16 %v1407
        %v1420 = vpack.c.b16 %v1417, %v1416
        %v1421 = vpack.c.b16 %v1419, %v1418
        %v1425 = vsel %vm565, %v1403, 0
        %1427 = vmatpush.bf16.msra.mxu0 0
        %1428 = vmatpush.bf16.msra.mxu0 0
        %1429 = vmatpush.bf16.msra.mxu0 0
        %1430 = vmatpush.bf16.msra.mxu0 0
        %1431 = vmatpush.bf16.msra.mxu0 0
        %1432 = vmatpush.bf16.msra.mxu0 0
        %1433 = vmatpush.bf16.msra.mxu0 %v1421
        %1434 = vmatpush.bf16.msra.mxu0 %v1420
        %1435 = vmatmul.bf16.gmra.mxu0 %v1425
        %v1436 = vpop.f32.mrf.mxu0
        %v1437 = vadd.f32 %v1410, %v1436
        %v1438 = vpop.f32.mrf.mxu0
        %1439 = vdwg.mxu0
        %v1440 = vmax.f32 %v1437, 0.0
        %v1441 = vpack.c.bf16 %v1440, %v1440
        %v1442 = vld [vmem:[%s11] sm:$0xf]
        %v1443 = vld [vmem:[%s11 + $0x4] sm:$0xf]
        %v1444 = vld [vmem:[%s11 + $0x8] sm:$0xf]
        %v1445 = vld [vmem:[%s11 + $0xc] sm:$0xf]
        %v1446 = vld [vmem:[%s11 + $0x10] sm:$0xf]
        %v1447 = vld [vmem:[%s11 + $0x14] sm:$0xf]
        %v1448 = vld [vmem:[%s11 + $0x18] sm:$0xf]
        %v1449 = vld [vmem:[%s11 + $0x1c] sm:$0xf]
        %v1450 = vld [vmem:[%s12] sm:$0x1]
        %v1452 = vperm.slane %v1450, 0
        %v1462 = vunpack.c.l.b16 %v1442
        %v1463 = vunpack.c.l.b16 %v1443
        %v1464 = vunpack.c.l.b16 %v1444
        %v1465 = vunpack.c.l.b16 %v1445
        %v1466 = vunpack.c.l.b16 %v1446
        %v1467 = vunpack.c.l.b16 %v1447
        %v1468 = vunpack.c.l.b16 %v1448
        %v1469 = vunpack.c.l.b16 %v1449
        %v1470 = vpack.c.b16 %v1463, %v1462
        %v1471 = vpack.c.b16 %v1465, %v1464
        %v1472 = vpack.c.b16 %v1467, %v1466
        %v1473 = vpack.c.b16 %v1469, %v1468
        %vm1478 = vcmask 523264
        %v1480 = vsel %vm1478, %v1441, 0
        %1482 = vmatpush.bf16.msra.mxu0 0
        %1483 = vmatpush.bf16.msra.mxu0 0
        %1484 = vmatpush.bf16.msra.mxu0 0
        %1485 = vmatpush.bf16.msra.mxu0 0
        %1486 = vmatpush.bf16.msra.mxu0 %v1473
        %1487 = vmatpush.bf16.msra.mxu0 %v1472
        %1488 = vmatpush.bf16.msra.mxu0 %v1471
        %1489 = vmatpush.bf16.msra.mxu0 %v1470
        %1490 = vmatmul.bf16.gmra.mxu0 %v1480
        %v1491 = vpop.f32.mrf.mxu0
        %v1492 = vadd.f32 %v1452, %v1491
        %v1493 = vpop.f32.mrf.mxu0
        %1494 = vdwg.mxu0
        %v1495 = vadd.f32 %v1402, %v1492
        %v1496 = vld [vmem:[%s13] sm:$0x1]
        %v1497 = vld [vmem:[%s14] sm:$0x1]
        %v1498 = vsel %vm565, %v1495, 0.0
        %1499 = vadd.xlane.f32.xlu0 %v1498
        %v1500 = vpop.xlane.xlu0 %1499
        %v1501 = vmul.f32 %v1500, %v1375
        %v1502 = vsub.f32 %v1495, %v1501
        %v1503 = vmul.f32 %v1502, %v1502
        %v1504 = vsel %vm565, %v1503, 0.0
        %1505 = vadd.xlane.f32.xlu0 %v1504
        %v1506 = vpop.xlane.xlu0 %1505
        %v1507 = vmul.f32 %v1506, %v1375
        %v1508 = vadd.f32 %v1507, 1e-05
        %v1509 = vrsqrt.pop %v1508
        %v1510 = vmul.f32 %v1509, %v1508
        %v1511 = vmul.f32 %v1510, %v1509
        %v1512 = vmul.f32 0.5, %v1511
        %v1513 = vsub.f32 1.5, %v1512
        %v1514 = vmul.f32 %v1509, %v1513
        %vm1515 = vweird.f32 %v1508
        %vm1516 = vweird.f32 %v1509
        %vm1517 = vmor %vm1515, %vm1516
        %v1518 = vsel %vm1517, %v1509, %v1514
        %v1519 = vmul.f32 %v1502, %v1518
        %v1521 = vperm.slane %v1496, 0
        %v1523 = vmul.f32 %v1519, %v1521
        %v1525 = vperm.slane %v1497, 0
        %v1527 = vadd.f32 %v1523, %v1525
        %1528 = vst.msk [vmem:[%s533] sm:$0xff] %vm565, %v1527
        %s1529 = sand.u32 %s373, 1
        %s1530 = scalar_lea.sflag [#allocation4], %s1529
        %s1531 = sand.u32 %s373, 1
        %s1532 = smul.addr %s1531, 8
        %s1533 = scalar_lea.vmem [#allocation7], %s1532
        // Predicated region
        $region89: #{tpu_custom_call.1} parent=79 // pred_check
          %p1534 = pneg %p383
        $region90: #{tpu_custom_call.1} parent=79 // pred_check_branch
          %1536 = sbr.rel (%p1534) target = $region92
        $region91: #{tpu_custom_call.1} parent=79 // pred_region
          %1538 = vsyncadd %s1530, 0
          %s1539 = sadd.s32 %s36, %s35
          %s1540 = smul.addr %s1539, 8
          %s1541 = scalar_lea.hbm %s15, %s1540
          %s1543 = sshll.u32 %s1533, 4
          %s1544 = int_to_ptr.vmem [resolvable:$true] %s1543
          %s1545 = sshll.u32 %s1541, 4
          %s1546 = int_to_ptr.hbm [resolvable:$true] %s1545
          %1548 = dma.vmem_to_hbm [thread:$0]  %s1544, 128, %s1546, %s1530
        $region92: #{tpu_custom_call.1} parent=79 // pred_fallthru
          _
      $region80: #{tpu_custom_call.1} parent=5 // pred_fallthru
        _
      %p1549 = scmp.le.s32.totalorder 2, %s26
      // Predicated region
      $region93: #{tpu_custom_call.1} parent=5 // pred_check
        %p1550 = pneg %p1549
      $region94: #{tpu_custom_call.1} parent=5 // pred_check_branch
        %1552 = sbr.rel (%p1550) target = $region96
      $region95: #{tpu_custom_call.1} parent=5 // pred_region
        %s1553 = ssub.s32 %s26, 2
        // Predicated region
        $region97: #{tpu_custom_call.1} parent=95 // pred_check
          %p1554 = pneg %p389
        $region98: #{tpu_custom_call.1} parent=95 // pred_check_branch
          %1556 = sbr.rel (%p1554) target = $region100
        $region99: #{tpu_custom_call.1} parent=95 // pred_region
          %s1557 = sand.u32 %s374, 1
          %s1558 = scalar_lea.sflag [#allocation4], %s1557
          %s1559 = sand.u32 %s374, 1
          %s1560 = smul.addr %s1559, 8
          %s1561 = scalar_lea.vmem [#allocation7], %s1560
          %1563 = dma.done %s1558, 128
        $region100: #{tpu_custom_call.1} parent=95 // pred_fallthru
          _
      $region96: #{tpu_custom_call.1} parent=5 // pred_fallthru
        _
    $region6: #{tpu_custom_call.1} parent=1 // loop_footer
      %s30 = sadd.s32 1, %s26
    $region7: #{tpu_custom_call.1} parent=1 // loop_footer_branch
      %25 = sbr.rel target = $region3
    $region8: #{tpu_custom_call.1} parent=1 // loop_exit
      _
    %1564 = vsyncpa [#allocation3], 1
    %s1565 = scalar_lea.sflag [#allocation3], 1
    %1566 = vsyncpa %s1565, 1
    %1567 = vsyncpa [#allocation6], 1
    %1568 = vsyncpa [#allocation4], 1
    %s1569 = scalar_lea.sflag [#allocation4], 1
    %1570 = vsyncpa %s1569, 1

</llo_original>
